<compile_context>
chip_gen: v7x
topology: tpu7x:2x2x1
jax: 0.10.0
libtpu: 0.0.40
codegen_flags: <defaults>
</compile_context>

<pallas_src>
import functools

import jax
import jax.numpy as jnp
from jax import lax
from jax.experimental import pallas as pl
from jax.experimental.pallas import tpu as pltpu

SUBLANE = 8     # f32 sublane width


def decoder_kernel(xw1_ref, whh1_ref, w2_ref, b2_ref, out_ref):
    """Full 2-layer LSTM recurrence over all timesteps, single invocation.

    xw1_ref : (Bp, 4*D)       precomputed x @ W_ih1 + b1 (time-invariant)
    whh1_ref: (D, 4*D)        layer-1 recurrent weights, packed gates [i|f|g|o]
    w2_ref  : (D+H, 4*H)      row-stacked [W_ih2; W_hh2], packed gates
    b2_ref  : (1, 4*H)        fused layer-2 bias
    out_ref : (seq_len, Bp, 2*H)  per-timestep [h2 | c2] (lane-dense store)
    """
    seq_len, Bp, _ = out_ref.shape
    D = whh1_ref.shape[0]
    H = w2_ref.shape[1] // 4

    # Hoist only small loop invariants (3 vregs at D=32,H=64). The big weight
    # matrices are re-read from VMEM at their point of use inside the loop so
    # their live ranges stay bounded to a single dot (no spills on the
    # serial recurrence).
    xw1 = xw1_ref[...]                                   # (Bp, 4D)
    b2 = jnp.broadcast_to(b2_ref[...], (Bp, 4 * H))      # (Bp, 4H)

    def sig(x):
        # sigmoid via tanh: 1 EUP push instead of 2 (exp + reciprocal);
        # the extra mul/add go to the 4-wide VALU which has slack.
        return 0.5 * jnp.tanh(0.5 * x) + 0.5

    def cell_update(gates, c, hid):
        # gates packed [i | f | g | o], each `hid` lanes wide. Do the
        # transcendentals on the whole packed vreg(s), then slice.
        s = sig(gates)
        i = s[:, 0 * hid:1 * hid]
        f = s[:, 1 * hid:2 * hid]
        g = jnp.tanh(gates[:, 2 * hid:3 * hid])
        o = s[:, 3 * hid:4 * hid]
        c_new = f * c + i * g
        h_new = o * jnp.tanh(c_new)
        return h_new, c_new

    def layer1(h1, c1):
        gates1 = xw1 + jnp.dot(h1, whh1_ref[...],
                               preferred_element_type=jnp.float32)
        return cell_update(gates1, c1, D)

    def step(t, carry):
        # Skewed schedule: the carry already holds layer-1 state for step t.
        # Layer-1 for step t+1 depends only on (h1_t, c1_t), so its matmul can
        # overlap layer-2's transcendental/VPU chain for step t.
        h1, c1, h2, c2 = carry
        inp2 = jnp.concatenate([h1, h2], axis=-1)        # (Bp, D+H), K = 96
        gates2 = jnp.dot(inp2, w2_ref[...],
                         preferred_element_type=jnp.float32) + b2
        h1n, c1n = layer1(h1, c1)                        # layer 1, step t+1
        h2, c2 = cell_update(gates2, c2, H)              # layer 2, step t
        # Lane-dense 2H = 128 wide unmasked store; wrapper keeps [..., :H].
        out_ref[t] = jnp.concatenate([h2, c2], axis=-1)
        return (h1n, c1n, h2, c2)

    zD = jnp.zeros((Bp, D), jnp.float32)
    zH = jnp.zeros((Bp, H), jnp.float32)
    # Prologue: layer-1 step 0 (h1 = 0 so gates1 == xw1, skip the dead dot).
    h1, c1 = cell_update(xw1, zD, D)
    lax.fori_loop(0, seq_len, step, (h1, c1, zH, zH),
                  unroll=min(seq_len, 8))


def decoder_forward(x, lengths, params, seq_len):
    """Pallas implementation of Decoder.forward. `lengths` unused (as in torch)."""
    del lengths  # the PyTorch forward ignores it too
    B, D = x.shape
    H = 2 * D
    Bp = max(((B + SUBLANE - 1) // SUBLANE) * SUBLANE, SUBLANE)

    # Packed-gate layout: with D=32 / H=64 the natural PyTorch gate packing
    # (4*D = 128, 4*H = 256 columns) is already lane-aligned, so no per-gate
    # 128-lane padding is needed; weights are used at their natural sizes.
    w_hh1 = params["w_hh1"].astype(jnp.float32)                      # (D, 4D)
    w2 = jnp.concatenate([params["w_ih2"], params["w_hh2"]],
                         axis=0).astype(jnp.float32)                 # (D+H, 4H)
    b2 = params["b2"].astype(jnp.float32)                            # (1, 4H)

    # Pad batch to a full sublane group and hoist the time-invariant
    # layer-1 input transform (x is the same at every timestep).
    x_pad = jnp.zeros((Bp, D), jnp.float32).at[:B].set(x.astype(jnp.float32))
    xw1 = jnp.dot(x_pad, params["w_ih1"].astype(jnp.float32),
                  preferred_element_type=jnp.float32) + params["b1"]

    h2c2 = pl.pallas_call(
        decoder_kernel,
        out_shape=jax.ShapeDtypeStruct((seq_len, Bp, 2 * H), jnp.float32),
        in_specs=[pl.BlockSpec(memory_space=pltpu.MemorySpace.VMEM)] * 4,
        out_specs=pl.BlockSpec(memory_space=pltpu.MemorySpace.VMEM),
    )(xw1, w_hh1, w2, b2)

    # (seq_len, Bp, 2H) -> (B, seq_len, H); tiny F=2 projection done in XLA
    # so the kernel output stays lane-dense.
    h2 = jnp.transpose(h2c2[:, :B, :H], (1, 0, 2))
    return jnp.dot(h2, params["w_out"]) + params["b_out"]


# ---------------------------- reference & init -----------------------------

def _lstm_cell_ref(inp, h, c, w_ih, w_hh, b, hid):
    gates = jnp.dot(inp, w_ih) + jnp.dot(h, w_hh) + b
    i = jax.nn.sigmoid(gates[:, 0 * hid:1 * hid])
    f = jax.nn.sigmoid(gates[:, 1 * hid:2 * hid])
    g = jnp.tanh(gates[:, 2 * hid:3 * hid])
    o = jax.nn.sigmoid(gates[:, 3 * hid:4 * hid])
    c_new = f * c + i * g
    h_new = o * jnp.tanh(c_new)
    return h_new, c_new


def decoder_reference(x, params, seq_len):
    """Pure-JAX reference (lax.scan) for correctness check."""
    B, D = x.shape
    H = 2 * D

    def step(carry, _):
        h1, c1, h2, c2 = carry
        h1, c1 = _lstm_cell_ref(x, h1, c1, params["w_ih1"], params["w_hh1"],
                                params["b1"], D)
        h2, c2 = _lstm_cell_ref(h1, h2, c2, params["w_ih2"], params["w_hh2"],
                                params["b2"], H)
        y = jnp.dot(h2, params["w_out"]) + params["b_out"]
        return (h1, c1, h2, c2), y

    init = (jnp.zeros((B, D)), jnp.zeros((B, D)),
            jnp.zeros((B, H)), jnp.zeros((B, H)))
    _, ys = lax.scan(step, init, None, length=seq_len)
    return jnp.transpose(ys, (1, 0, 2))


def init_params(key, input_dim, n_features):
    """Deterministic synthetic params (PyTorch-style uniform init, b_ih+b_hh fused)."""
    D = input_dim
    H = 2 * D
    ks = jax.random.split(key, 9)
    k1 = 1.0 / jnp.sqrt(D)
    k2 = 1.0 / jnp.sqrt(H)
    u = lambda k, shape, bound: jax.random.uniform(
        k, shape, jnp.float32, minval=-bound, maxval=bound)
    return {
        "w_ih1": u(ks[0], (D, 4 * D), k1),
        "w_hh1": u(ks[1], (D, 4 * D), k1),
        "b1":    u(ks[2], (1, 4 * D), k1),   # fused b_ih + b_hh
        "w_ih2": u(ks[3], (D, 4 * H), k2),
        "w_hh2": u(ks[4], (H, 4 * H), k2),
        "b2":    u(ks[5], (1, 4 * H), k2),   # fused b_ih + b_hh
        "w_out": u(ks[6], (H, n_features), k2),
        "b_out": u(ks[7], (1, n_features), k2),
    }


if __name__ == "__main__":
    # Small shapes consistent with Decoder(seq_len, input_dim, n_features):
    B, seq_len, input_dim, n_features = 2, 8, 32, 2

    key = jax.random.PRNGKey(0)
    kx, kp = jax.random.split(key)
    x = jax.random.normal(kx, (B, input_dim), jnp.float32)   # latent vectors
    lengths = jnp.full((B,), seq_len, jnp.int32)             # unused by forward
    params = init_params(kp, input_dim, n_features)

    run = jax.jit(functools.partial(decoder_forward, seq_len=seq_len))
    out = jax.block_until_ready(run(x, lengths, params))

    assert out.shape == (B, seq_len, n_features), out.shape

    ref = decoder_reference(x, params, seq_len)
    assert jnp.allclose(out, ref, atol=1e-4, rtol=1e-4), (
        float(jnp.max(jnp.abs(out - ref))))

    print("KERNEL_OK")
</pallas_src>

<mosaic_0001>
module attributes {stable_mosaic.version = 11 : i64} {
  func.func @decoder_kernel(%arg0: memref<8x128xf32, #tpu.memory_space<vmem>>, %arg1: memref<32x128xf32, #tpu.memory_space<vmem>>, %arg2: memref<96x256xf32, #tpu.memory_space<vmem>>, %arg3: memref<1x256xf32, #tpu.memory_space<vmem>>, %arg4: memref<8x8x128xf32, #tpu.memory_space<vmem>>) attributes {dimension_semantics = [], scalar_prefetch = 0 : i64, scratch_operands = 0 : i64, tpu.core_type = #tpu.core_type<tc>} {
    %c0 = arith.constant 0 : index
    %c0_0 = arith.constant 0 : index
    %0 = vector.load %arg0[%c0, %c0_0] : memref<8x128xf32, #tpu.memory_space<vmem>>, vector<8x128xf32>
    %c0_1 = arith.constant 0 : index
    %c0_2 = arith.constant 0 : index
    %1 = vector.load %arg3[%c0_1, %c0_2] : memref<1x256xf32, #tpu.memory_space<vmem>>, vector<1x256xf32>
    %2 = vector.shape_cast %1 : vector<1x256xf32> to vector<1x256xf32>
    %3 = vector.broadcast %2 : vector<1x256xf32> to vector<8x256xf32>
    %cst = arith.constant 0.000000e+00 : f32
    %4 = vector.broadcast %cst : f32 to vector<8x32xf32>
    %cst_3 = arith.constant 0.000000e+00 : f32
    %5 = vector.broadcast %cst_3 : f32 to vector<8x64xf32>
    %cst_4 = arith.constant 5.000000e-01 : f32
    %6 = vector.broadcast %cst_4 : f32 to vector<8x128xf32>
    %7 = arith.mulf %6, %0 : vector<8x128xf32>
    %8 = math.tanh %7 : vector<8x128xf32>
    %cst_5 = arith.constant 5.000000e-01 : f32
    %9 = vector.broadcast %cst_5 : f32 to vector<8x128xf32>
    %10 = arith.mulf %9, %8 : vector<8x128xf32>
    %cst_6 = arith.constant 5.000000e-01 : f32
    %11 = vector.broadcast %cst_6 : f32 to vector<8x128xf32>
    %12 = arith.addf %10, %11 : vector<8x128xf32>
    %13 = vector.extract_strided_slice %12 {offsets = [0, 0], sizes = [8, 32], strides = [1, 1]} : vector<8x128xf32> to vector<8x32xf32>
    %14 = vector.extract_strided_slice %12 {offsets = [0, 32], sizes = [8, 32], strides = [1, 1]} : vector<8x128xf32> to vector<8x32xf32>
    %15 = vector.extract_strided_slice %0 {offsets = [0, 64], sizes = [8, 32], strides = [1, 1]} : vector<8x128xf32> to vector<8x32xf32>
    %16 = math.tanh %15 : vector<8x32xf32>
    %17 = vector.extract_strided_slice %12 {offsets = [0, 96], sizes = [8, 32], strides = [1, 1]} : vector<8x128xf32> to vector<8x32xf32>
    %18 = arith.mulf %14, %4 : vector<8x32xf32>
    %19 = arith.mulf %13, %16 : vector<8x32xf32>
    %20 = arith.addf %18, %19 : vector<8x32xf32>
    %21 = math.tanh %20 : vector<8x32xf32>
    %22 = arith.mulf %17, %21 : vector<8x32xf32>
    %c0_i32 = arith.constant 0 : i32
    %23 = tpu.concatenate %22, %5 in 1 : vector<8x32xf32>, vector<8x64xf32> -> vector<8x96xf32>
    %c0_7 = arith.constant 0 : index
    %c0_8 = arith.constant 0 : index
    %24 = vector.load %arg2[%c0_7, %c0_8] : memref<96x256xf32, #tpu.memory_space<vmem>>, vector<96x256xf32>
    %cst_9 = arith.constant dense<0.000000e+00> : vector<8x256xf32>
    %25 = tpu.matmul %23, %24, %cst_9 {dimension_numbers = #tpu.dot_dimension_numbers<[1], [0], [0], [1], [0, 0, 1, 1], [], []>} : vector<8x96xf32>, vector<96x256xf32>, vector<8x256xf32> -> vector<8x256xf32>
    %26 = arith.addf %25, %3 : vector<8x256xf32>
    %c0_10 = arith.constant 0 : index
    %c0_11 = arith.constant 0 : index
    %27 = vector.load %arg1[%c0_10, %c0_11] : memref<32x128xf32, #tpu.memory_space<vmem>>, vector<32x128xf32>
    %cst_12 = arith.constant dense<0.000000e+00> : vector<8x128xf32>
    %28 = tpu.matmul %22, %27, %cst_12 {dimension_numbers = #tpu.dot_dimension_numbers<[1], [0], [0], [1], [0, 0, 1, 1], [], []>} : vector<8x32xf32>, vector<32x128xf32>, vector<8x128xf32> -> vector<8x128xf32>
    %29 = arith.addf %0, %28 : vector<8x128xf32>
    %cst_13 = arith.constant 5.000000e-01 : f32
    %30 = vector.broadcast %cst_13 : f32 to vector<8x128xf32>
    %31 = arith.mulf %30, %29 : vector<8x128xf32>
    %32 = math.tanh %31 : vector<8x128xf32>
    %cst_14 = arith.constant 5.000000e-01 : f32
    %33 = vector.broadcast %cst_14 : f32 to vector<8x128xf32>
    %34 = arith.mulf %33, %32 : vector<8x128xf32>
    %cst_15 = arith.constant 5.000000e-01 : f32
    %35 = vector.broadcast %cst_15 : f32 to vector<8x128xf32>
    %36 = arith.addf %34, %35 : vector<8x128xf32>
    %37 = vector.extract_strided_slice %36 {offsets = [0, 0], sizes = [8, 32], strides = [1, 1]} : vector<8x128xf32> to vector<8x32xf32>
    %38 = vector.extract_strided_slice %36 {offsets = [0, 32], sizes = [8, 32], strides = [1, 1]} : vector<8x128xf32> to vector<8x32xf32>
    %39 = vector.extract_strided_slice %29 {offsets = [0, 64], sizes = [8, 32], strides = [1, 1]} : vector<8x128xf32> to vector<8x32xf32>
    %40 = math.tanh %39 : vector<8x32xf32>
    %41 = vector.extract_strided_slice %36 {offsets = [0, 96], sizes = [8, 32], strides = [1, 1]} : vector<8x128xf32> to vector<8x32xf32>
    %42 = arith.mulf %38, %20 : vector<8x32xf32>
    %43 = arith.mulf %37, %40 : vector<8x32xf32>
    %44 = arith.addf %42, %43 : vector<8x32xf32>
    %45 = math.tanh %44 : vector<8x32xf32>
    %46 = arith.mulf %41, %45 : vector<8x32xf32>
    %cst_16 = arith.constant 5.000000e-01 : f32
    %47 = vector.broadcast %cst_16 : f32 to vector<8x256xf32>
    %48 = arith.mulf %47, %26 : vector<8x256xf32>
    %49 = math.tanh %48 : vector<8x256xf32>
    %cst_17 = arith.constant 5.000000e-01 : f32
    %50 = vector.broadcast %cst_17 : f32 to vector<8x256xf32>
    %51 = arith.mulf %50, %49 : vector<8x256xf32>
    %cst_18 = arith.constant 5.000000e-01 : f32
    %52 = vector.broadcast %cst_18 : f32 to vector<8x256xf32>
    %53 = arith.addf %51, %52 : vector<8x256xf32>
    %54 = vector.extract_strided_slice %53 {offsets = [0, 0], sizes = [8, 64], strides = [1, 1]} : vector<8x256xf32> to vector<8x64xf32>
    %55 = vector.extract_strided_slice %53 {offsets = [0, 64], sizes = [8, 64], strides = [1, 1]} : vector<8x256xf32> to vector<8x64xf32>
    %56 = vector.extract_strided_slice %26 {offsets = [0, 128], sizes = [8, 64], strides = [1, 1]} : vector<8x256xf32> to vector<8x64xf32>
    %57 = math.tanh %56 : vector<8x64xf32>
    %58 = vector.extract_strided_slice %53 {offsets = [0, 192], sizes = [8, 64], strides = [1, 1]} : vector<8x256xf32> to vector<8x64xf32>
    %59 = arith.mulf %55, %5 : vector<8x64xf32>
    %60 = arith.mulf %54, %57 : vector<8x64xf32>
    %61 = arith.addf %59, %60 : vector<8x64xf32>
    %62 = math.tanh %61 : vector<8x64xf32>
    %63 = arith.mulf %58, %62 : vector<8x64xf32>
    %64 = tpu.concatenate %63, %61 in 1 : vector<8x64xf32>, vector<8x64xf32> -> vector<8x128xf32>
    %65 = arith.index_cast %c0_i32 : i32 to index
    %c0_19 = arith.constant 0 : index
    %c0_20 = arith.constant 0 : index
    %66 = vector.load %arg4[%65, %c0_19, %c0_20] : memref<8x8x128xf32, #tpu.memory_space<vmem>>, vector<1x8x128xf32>
    %67 = vector.shape_cast %66 : vector<1x8x128xf32> to vector<8x128xf32>
    %68 = vector.shape_cast %64 : vector<8x128xf32> to vector<1x8x128xf32>
    tpu.vector_store %arg4[%65, %c0_19, %c0_20], %68 {strides = array<i32>} : memref<8x8x128xf32, #tpu.memory_space<vmem>>, vector<1x8x128xf32>,
    %c1_i32 = arith.constant 1 : i32
    %69 = tpu.concatenate %46, %63 in 1 : vector<8x32xf32>, vector<8x64xf32> -> vector<8x96xf32>
    %c0_21 = arith.constant 0 : index
    %c0_22 = arith.constant 0 : index
    %70 = vector.load %arg2[%c0_21, %c0_22] : memref<96x256xf32, #tpu.memory_space<vmem>>, vector<96x256xf32>
    %cst_23 = arith.constant dense<0.000000e+00> : vector<8x256xf32>
    %71 = tpu.matmul %69, %70, %cst_23 {dimension_numbers = #tpu.dot_dimension_numbers<[1], [0], [0], [1], [0, 0, 1, 1], [], []>} : vector<8x96xf32>, vector<96x256xf32>, vector<8x256xf32> -> vector<8x256xf32>
    %72 = arith.addf %71, %3 : vector<8x256xf32>
    %c0_24 = arith.constant 0 : index
    %c0_25 = arith.constant 0 : index
    %73 = vector.load %arg1[%c0_24, %c0_25] : memref<32x128xf32, #tpu.memory_space<vmem>>, vector<32x128xf32>
    %cst_26 = arith.constant dense<0.000000e+00> : vector<8x128xf32>
    %74 = tpu.matmul %46, %73, %cst_26 {dimension_numbers = #tpu.dot_dimension_numbers<[1], [0], [0], [1], [0, 0, 1, 1], [], []>} : vector<8x32xf32>, vector<32x128xf32>, vector<8x128xf32> -> vector<8x128xf32>
    %75 = arith.addf %0, %74 : vector<8x128xf32>
    %cst_27 = arith.constant 5.000000e-01 : f32
    %76 = vector.broadcast %cst_27 : f32 to vector<8x128xf32>
    %77 = arith.mulf %76, %75 : vector<8x128xf32>
    %78 = math.tanh %77 : vector<8x128xf32>
    %cst_28 = arith.constant 5.000000e-01 : f32
    %79 = vector.broadcast %cst_28 : f32 to vector<8x128xf32>
    %80 = arith.mulf %79, %78 : vector<8x128xf32>
    %cst_29 = arith.constant 5.000000e-01 : f32
    %81 = vector.broadcast %cst_29 : f32 to vector<8x128xf32>
    %82 = arith.addf %80, %81 : vector<8x128xf32>
    %83 = vector.extract_strided_slice %82 {offsets = [0, 0], sizes = [8, 32], strides = [1, 1]} : vector<8x128xf32> to vector<8x32xf32>
    %84 = vector.extract_strided_slice %82 {offsets = [0, 32], sizes = [8, 32], strides = [1, 1]} : vector<8x128xf32> to vector<8x32xf32>
    %85 = vector.extract_strided_slice %75 {offsets = [0, 64], sizes = [8, 32], strides = [1, 1]} : vector<8x128xf32> to vector<8x32xf32>
    %86 = math.tanh %85 : vector<8x32xf32>
    %87 = vector.extract_strided_slice %82 {offsets = [0, 96], sizes = [8, 32], strides = [1, 1]} : vector<8x128xf32> to vector<8x32xf32>
    %88 = arith.mulf %84, %44 : vector<8x32xf32>
    %89 = arith.mulf %83, %86 : vector<8x32xf32>
    %90 = arith.addf %88, %89 : vector<8x32xf32>
    %91 = math.tanh %90 : vector<8x32xf32>
    %92 = arith.mulf %87, %91 : vector<8x32xf32>
    %cst_30 = arith.constant 5.000000e-01 : f32
    %93 = vector.broadcast %cst_30 : f32 to vector<8x256xf32>
    %94 = arith.mulf %93, %72 : vector<8x256xf32>
    %95 = math.tanh %94 : vector<8x256xf32>
    %cst_31 = arith.constant 5.000000e-01 : f32
    %96 = vector.broadcast %cst_31 : f32 to vector<8x256xf32>
    %97 = arith.mulf %96, %95 : vector<8x256xf32>
    %cst_32 = arith.constant 5.000000e-01 : f32
    %98 = vector.broadcast %cst_32 : f32 to vector<8x256xf32>
    %99 = arith.addf %97, %98 : vector<8x256xf32>
    %100 = vector.extract_strided_slice %99 {offsets = [0, 0], sizes = [8, 64], strides = [1, 1]} : vector<8x256xf32> to vector<8x64xf32>
    %101 = vector.extract_strided_slice %99 {offsets = [0, 64], sizes = [8, 64], strides = [1, 1]} : vector<8x256xf32> to vector<8x64xf32>
    %102 = vector.extract_strided_slice %72 {offsets = [0, 128], sizes = [8, 64], strides = [1, 1]} : vector<8x256xf32> to vector<8x64xf32>
    %103 = math.tanh %102 : vector<8x64xf32>
    %104 = vector.extract_strided_slice %99 {offsets = [0, 192], sizes = [8, 64], strides = [1, 1]} : vector<8x256xf32> to vector<8x64xf32>
    %105 = arith.mulf %101, %61 : vector<8x64xf32>
    %106 = arith.mulf %100, %103 : vector<8x64xf32>
    %107 = arith.addf %105, %106 : vector<8x64xf32>
    %108 = math.tanh %107 : vector<8x64xf32>
    %109 = arith.mulf %104, %108 : vector<8x64xf32>
    %110 = tpu.concatenate %109, %107 in 1 : vector<8x64xf32>, vector<8x64xf32> -> vector<8x128xf32>
    %111 = arith.index_cast %c1_i32 : i32 to index
    %c0_33 = arith.constant 0 : index
    %c0_34 = arith.constant 0 : index
    %112 = vector.load %arg4[%111, %c0_33, %c0_34] : memref<8x8x128xf32, #tpu.memory_space<vmem>>, vector<1x8x128xf32>
    %113 = vector.shape_cast %112 : vector<1x8x128xf32> to vector<8x128xf32>
    %114 = vector.shape_cast %110 : vector<8x128xf32> to vector<1x8x128xf32>
    tpu.vector_store %arg4[%111, %c0_33, %c0_34], %114 {strides = array<i32>} : memref<8x8x128xf32, #tpu.memory_space<vmem>>, vector<1x8x128xf32>,
    %c2_i32 = arith.constant 2 : i32
    %115 = tpu.concatenate %92, %109 in 1 : vector<8x32xf32>, vector<8x64xf32> -> vector<8x96xf32>
    %c0_35 = arith.constant 0 : index
    %c0_36 = arith.constant 0 : index
    %116 = vector.load %arg2[%c0_35, %c0_36] : memref<96x256xf32, #tpu.memory_space<vmem>>, vector<96x256xf32>
    %cst_37 = arith.constant dense<0.000000e+00> : vector<8x256xf32>
    %117 = tpu.matmul %115, %116, %cst_37 {dimension_numbers = #tpu.dot_dimension_numbers<[1], [0], [0], [1], [0, 0, 1, 1], [], []>} : vector<8x96xf32>, vector<96x256xf32>, vector<8x256xf32> -> vector<8x256xf32>
    %118 = arith.addf %117, %3 : vector<8x256xf32>
    %c0_38 = arith.constant 0 : index
    %c0_39 = arith.constant 0 : index
    %119 = vector.load %arg1[%c0_38, %c0_39] : memref<32x128xf32, #tpu.memory_space<vmem>>, vector<32x128xf32>
    %cst_40 = arith.constant dense<0.000000e+00> : vector<8x128xf32>
    %120 = tpu.matmul %92, %119, %cst_40 {dimension_numbers = #tpu.dot_dimension_numbers<[1], [0], [0], [1], [0, 0, 1, 1], [], []>} : vector<8x32xf32>, vector<32x128xf32>, vector<8x128xf32> -> vector<8x128xf32>
    %121 = arith.addf %0, %120 : vector<8x128xf32>
    %cst_41 = arith.constant 5.000000e-01 : f32
    %122 = vector.broadcast %cst_41 : f32 to vector<8x128xf32>
    %123 = arith.mulf %122, %121 : vector<8x128xf32>
    %124 = math.tanh %123 : vector<8x128xf32>
    %cst_42 = arith.constant 5.000000e-01 : f32
    %125 = vector.broadcast %cst_42 : f32 to vector<8x128xf32>
    %126 = arith.mulf %125, %124 : vector<8x128xf32>
    %cst_43 = arith.constant 5.000000e-01 : f32
    %127 = vector.broadcast %cst_43 : f32 to vector<8x128xf32>
    %128 = arith.addf %126, %127 : vector<8x128xf32>
    %129 = vector.extract_strided_slice %128 {offsets = [0, 0], sizes = [8, 32], strides = [1, 1]} : vector<8x128xf32> to vector<8x32xf32>
    %130 = vector.extract_strided_slice %128 {offsets = [0, 32], sizes = [8, 32], strides = [1, 1]} : vector<8x128xf32> to vector<8x32xf32>
    %131 = vector.extract_strided_slice %121 {offsets = [0, 64], sizes = [8, 32], strides = [1, 1]} : vector<8x128xf32> to vector<8x32xf32>
    %132 = math.tanh %131 : vector<8x32xf32>
    %133 = vector.extract_strided_slice %128 {offsets = [0, 96], sizes = [8, 32], strides = [1, 1]} : vector<8x128xf32> to vector<8x32xf32>
    %134 = arith.mulf %130, %90 : vector<8x32xf32>
    %135 = arith.mulf %129, %132 : vector<8x32xf32>
    %136 = arith.addf %134, %135 : vector<8x32xf32>
    %137 = math.tanh %136 : vector<8x32xf32>
    %138 = arith.mulf %133, %137 : vector<8x32xf32>
    %cst_44 = arith.constant 5.000000e-01 : f32
    %139 = vector.broadcast %cst_44 : f32 to vector<8x256xf32>
    %140 = arith.mulf %139, %118 : vector<8x256xf32>
    %141 = math.tanh %140 : vector<8x256xf32>
    %cst_45 = arith.constant 5.000000e-01 : f32
    %142 = vector.broadcast %cst_45 : f32 to vector<8x256xf32>
    %143 = arith.mulf %142, %141 : vector<8x256xf32>
    %cst_46 = arith.constant 5.000000e-01 : f32
    %144 = vector.broadcast %cst_46 : f32 to vector<8x256xf32>
    %145 = arith.addf %143, %144 : vector<8x256xf32>
    %146 = vector.extract_strided_slice %145 {offsets = [0, 0], sizes = [8, 64], strides = [1, 1]} : vector<8x256xf32> to vector<8x64xf32>
    %147 = vector.extract_strided_slice %145 {offsets = [0, 64], sizes = [8, 64], strides = [1, 1]} : vector<8x256xf32> to vector<8x64xf32>
    %148 = vector.extract_strided_slice %118 {offsets = [0, 128], sizes = [8, 64], strides = [1, 1]} : vector<8x256xf32> to vector<8x64xf32>
    %149 = math.tanh %148 : vector<8x64xf32>
    %150 = vector.extract_strided_slice %145 {offsets = [0, 192], sizes = [8, 64], strides = [1, 1]} : vector<8x256xf32> to vector<8x64xf32>
    %151 = arith.mulf %147, %107 : vector<8x64xf32>
    %152 = arith.mulf %146, %149 : vector<8x64xf32>
    %153 = arith.addf %151, %152 : vector<8x64xf32>
    %154 = math.tanh %153 : vector<8x64xf32>
    %155 = arith.mulf %150, %154 : vector<8x64xf32>
    %156 = tpu.concatenate %155, %153 in 1 : vector<8x64xf32>, vector<8x64xf32> -> vector<8x128xf32>
    %157 = arith.index_cast %c2_i32 : i32 to index
    %c0_47 = arith.constant 0 : index
    %c0_48 = arith.constant 0 : index
    %158 = vector.load %arg4[%157, %c0_47, %c0_48] : memref<8x8x128xf32, #tpu.memory_space<vmem>>, vector<1x8x128xf32>
    %159 = vector.shape_cast %158 : vector<1x8x128xf32> to vector<8x128xf32>
    %160 = vector.shape_cast %156 : vector<8x128xf32> to vector<1x8x128xf32>
    tpu.vector_store %arg4[%157, %c0_47, %c0_48], %160 {strides = array<i32>} : memref<8x8x128xf32, #tpu.memory_space<vmem>>, vector<1x8x128xf32>,
    %c3_i32 = arith.constant 3 : i32
    %161 = tpu.concatenate %138, %155 in 1 : vector<8x32xf32>, vector<8x64xf32> -> vector<8x96xf32>
    %c0_49 = arith.constant 0 : index
    %c0_50 = arith.constant 0 : index
    %162 = vector.load %arg2[%c0_49, %c0_50] : memref<96x256xf32, #tpu.memory_space<vmem>>, vector<96x256xf32>
    %cst_51 = arith.constant dense<0.000000e+00> : vector<8x256xf32>
    %163 = tpu.matmul %161, %162, %cst_51 {dimension_numbers = #tpu.dot_dimension_numbers<[1], [0], [0], [1], [0, 0, 1, 1], [], []>} : vector<8x96xf32>, vector<96x256xf32>, vector<8x256xf32> -> vector<8x256xf32>
    %164 = arith.addf %163, %3 : vector<8x256xf32>
    %c0_52 = arith.constant 0 : index
    %c0_53 = arith.constant 0 : index
    %165 = vector.load %arg1[%c0_52, %c0_53] : memref<32x128xf32, #tpu.memory_space<vmem>>, vector<32x128xf32>
    %cst_54 = arith.constant dense<0.000000e+00> : vector<8x128xf32>
    %166 = tpu.matmul %138, %165, %cst_54 {dimension_numbers = #tpu.dot_dimension_numbers<[1], [0], [0], [1], [0, 0, 1, 1], [], []>} : vector<8x32xf32>, vector<32x128xf32>, vector<8x128xf32> -> vector<8x128xf32>
    %167 = arith.addf %0, %166 : vector<8x128xf32>
    %cst_55 = arith.constant 5.000000e-01 : f32
    %168 = vector.broadcast %cst_55 : f32 to vector<8x128xf32>
    %169 = arith.mulf %168, %167 : vector<8x128xf32>
    %170 = math.tanh %169 : vector<8x128xf32>
    %cst_56 = arith.constant 5.000000e-01 : f32
    %171 = vector.broadcast %cst_56 : f32 to vector<8x128xf32>
    %172 = arith.mulf %171, %170 : vector<8x128xf32>
    %cst_57 = arith.constant 5.000000e-01 : f32
    %173 = vector.broadcast %cst_57 : f32 to vector<8x128xf32>
    %174 = arith.addf %172, %173 : vector<8x128xf32>
    %175 = vector.extract_strided_slice %174 {offsets = [0, 0], sizes = [8, 32], strides = [1, 1]} : vector<8x128xf32> to vector<8x32xf32>
    %176 = vector.extract_strided_slice %174 {offsets = [0, 32], sizes = [8, 32], strides = [1, 1]} : vector<8x128xf32> to vector<8x32xf32>
    %177 = vector.extract_strided_slice %167 {offsets = [0, 64], sizes = [8, 32], strides = [1, 1]} : vector<8x128xf32> to vector<8x32xf32>
    %178 = math.tanh %177 : vector<8x32xf32>
    %179 = vector.extract_strided_slice %174 {offsets = [0, 96], sizes = [8, 32], strides = [1, 1]} : vector<8x128xf32> to vector<8x32xf32>
    %180 = arith.mulf %176, %136 : vector<8x32xf32>
    %181 = arith.mulf %175, %178 : vector<8x32xf32>
    %182 = arith.addf %180, %181 : vector<8x32xf32>
    %183 = math.tanh %182 : vector<8x32xf32>
    %184 = arith.mulf %179, %183 : vector<8x32xf32>
    %cst_58 = arith.constant 5.000000e-01 : f32
    %185 = vector.broadcast %cst_58 : f32 to vector<8x256xf32>
    %186 = arith.mulf %185, %164 : vector<8x256xf32>
    %187 = math.tanh %186 : vector<8x256xf32>
    %cst_59 = arith.constant 5.000000e-01 : f32
    %188 = vector.broadcast %cst_59 : f32 to vector<8x256xf32>
    %189 = arith.mulf %188, %187 : vector<8x256xf32>
    %cst_60 = arith.constant 5.000000e-01 : f32
    %190 = vector.broadcast %cst_60 : f32 to vector<8x256xf32>
    %191 = arith.addf %189, %190 : vector<8x256xf32>
    %192 = vector.extract_strided_slice %191 {offsets = [0, 0], sizes = [8, 64], strides = [1, 1]} : vector<8x256xf32> to vector<8x64xf32>
    %193 = vector.extract_strided_slice %191 {offsets = [0, 64], sizes = [8, 64], strides = [1, 1]} : vector<8x256xf32> to vector<8x64xf32>
    %194 = vector.extract_strided_slice %164 {offsets = [0, 128], sizes = [8, 64], strides = [1, 1]} : vector<8x256xf32> to vector<8x64xf32>
    %195 = math.tanh %194 : vector<8x64xf32>
    %196 = vector.extract_strided_slice %191 {offsets = [0, 192], sizes = [8, 64], strides = [1, 1]} : vector<8x256xf32> to vector<8x64xf32>
    %197 = arith.mulf %193, %153 : vector<8x64xf32>
    %198 = arith.mulf %192, %195 : vector<8x64xf32>
    %199 = arith.addf %197, %198 : vector<8x64xf32>
    %200 = math.tanh %199 : vector<8x64xf32>
    %201 = arith.mulf %196, %200 : vector<8x64xf32>
    %202 = tpu.concatenate %201, %199 in 1 : vector<8x64xf32>, vector<8x64xf32> -> vector<8x128xf32>
    %203 = arith.index_cast %c3_i32 : i32 to index
    %c0_61 = arith.constant 0 : index
    %c0_62 = arith.constant 0 : index
    %204 = vector.load %arg4[%203, %c0_61, %c0_62] : memref<8x8x128xf32, #tpu.memory_space<vmem>>, vector<1x8x128xf32>
    %205 = vector.shape_cast %204 : vector<1x8x128xf32> to vector<8x128xf32>
    %206 = vector.shape_cast %202 : vector<8x128xf32> to vector<1x8x128xf32>
    tpu.vector_store %arg4[%203, %c0_61, %c0_62], %206 {strides = array<i32>} : memref<8x8x128xf32, #tpu.memory_space<vmem>>, vector<1x8x128xf32>,
    %c4_i32 = arith.constant 4 : i32
    %207 = tpu.concatenate %184, %201 in 1 : vector<8x32xf32>, vector<8x64xf32> -> vector<8x96xf32>
    %c0_63 = arith.constant 0 : index
    %c0_64 = arith.constant 0 : index
    %208 = vector.load %arg2[%c0_63, %c0_64] : memref<96x256xf32, #tpu.memory_space<vmem>>, vector<96x256xf32>
    %cst_65 = arith.constant dense<0.000000e+00> : vector<8x256xf32>
    %209 = tpu.matmul %207, %208, %cst_65 {dimension_numbers = #tpu.dot_dimension_numbers<[1], [0], [0], [1], [0, 0, 1, 1], [], []>} : vector<8x96xf32>, vector<96x256xf32>, vector<8x256xf32> -> vector<8x256xf32>
    %210 = arith.addf %209, %3 : vector<8x256xf32>
    %c0_66 = arith.constant 0 : index
    %c0_67 = arith.constant 0 : index
    %211 = vector.load %arg1[%c0_66, %c0_67] : memref<32x128xf32, #tpu.memory_space<vmem>>, vector<32x128xf32>
    %cst_68 = arith.constant dense<0.000000e+00> : vector<8x128xf32>
    %212 = tpu.matmul %184, %211, %cst_68 {dimension_numbers = #tpu.dot_dimension_numbers<[1], [0], [0], [1], [0, 0, 1, 1], [], []>} : vector<8x32xf32>, vector<32x128xf32>, vector<8x128xf32> -> vector<8x128xf32>
    %213 = arith.addf %0, %212 : vector<8x128xf32>
    %cst_69 = arith.constant 5.000000e-01 : f32
    %214 = vector.broadcast %cst_69 : f32 to vector<8x128xf32>
    %215 = arith.mulf %214, %213 : vector<8x128xf32>
    %216 = math.tanh %215 : vector<8x128xf32>
    %cst_70 = arith.constant 5.000000e-01 : f32
    %217 = vector.broadcast %cst_70 : f32 to vector<8x128xf32>
    %218 = arith.mulf %217, %216 : vector<8x128xf32>
    %cst_71 = arith.constant 5.000000e-01 : f32
    %219 = vector.broadcast %cst_71 : f32 to vector<8x128xf32>
    %220 = arith.addf %218, %219 : vector<8x128xf32>
    %221 = vector.extract_strided_slice %220 {offsets = [0, 0], sizes = [8, 32], strides = [1, 1]} : vector<8x128xf32> to vector<8x32xf32>
    %222 = vector.extract_strided_slice %220 {offsets = [0, 32], sizes = [8, 32], strides = [1, 1]} : vector<8x128xf32> to vector<8x32xf32>
    %223 = vector.extract_strided_slice %213 {offsets = [0, 64], sizes = [8, 32], strides = [1, 1]} : vector<8x128xf32> to vector<8x32xf32>
    %224 = math.tanh %223 : vector<8x32xf32>
    %225 = vector.extract_strided_slice %220 {offsets = [0, 96], sizes = [8, 32], strides = [1, 1]} : vector<8x128xf32> to vector<8x32xf32>
    %226 = arith.mulf %222, %182 : vector<8x32xf32>
    %227 = arith.mulf %221, %224 : vector<8x32xf32>
    %228 = arith.addf %226, %227 : vector<8x32xf32>
    %229 = math.tanh %228 : vector<8x32xf32>
    %230 = arith.mulf %225, %229 : vector<8x32xf32>
    %cst_72 = arith.constant 5.000000e-01 : f32
    %231 = vector.broadcast %cst_72 : f32 to vector<8x256xf32>
    %232 = arith.mulf %231, %210 : vector<8x256xf32>
    %233 = math.tanh %232 : vector<8x256xf32>
    %cst_73 = arith.constant 5.000000e-01 : f32
    %234 = vector.broadcast %cst_73 : f32 to vector<8x256xf32>
    %235 = arith.mulf %234, %233 : vector<8x256xf32>
    %cst_74 = arith.constant 5.000000e-01 : f32
    %236 = vector.broadcast %cst_74 : f32 to vector<8x256xf32>
    %237 = arith.addf %235, %236 : vector<8x256xf32>
    %238 = vector.extract_strided_slice %237 {offsets = [0, 0], sizes = [8, 64], strides = [1, 1]} : vector<8x256xf32> to vector<8x64xf32>
    %239 = vector.extract_strided_slice %237 {offsets = [0, 64], sizes = [8, 64], strides = [1, 1]} : vector<8x256xf32> to vector<8x64xf32>
    %240 = vector.extract_strided_slice %210 {offsets = [0, 128], sizes = [8, 64], strides = [1, 1]} : vector<8x256xf32> to vector<8x64xf32>
    %241 = math.tanh %240 : vector<8x64xf32>
    %242 = vector.extract_strided_slice %237 {offsets = [0, 192], sizes = [8, 64], strides = [1, 1]} : vector<8x256xf32> to vector<8x64xf32>
    %243 = arith.mulf %239, %199 : vector<8x64xf32>
    %244 = arith.mulf %238, %241 : vector<8x64xf32>
    %245 = arith.addf %243, %244 : vector<8x64xf32>
    %246 = math.tanh %245 : vector<8x64xf32>
    %247 = arith.mulf %242, %246 : vector<8x64xf32>
    %248 = tpu.concatenate %247, %245 in 1 : vector<8x64xf32>, vector<8x64xf32> -> vector<8x128xf32>
    %249 = arith.index_cast %c4_i32 : i32 to index
    %c0_75 = arith.constant 0 : index
    %c0_76 = arith.constant 0 : index
    %250 = vector.load %arg4[%249, %c0_75, %c0_76] : memref<8x8x128xf32, #tpu.memory_space<vmem>>, vector<1x8x128xf32>
    %251 = vector.shape_cast %250 : vector<1x8x128xf32> to vector<8x128xf32>
    %252 = vector.shape_cast %248 : vector<8x128xf32> to vector<1x8x128xf32>
    tpu.vector_store %arg4[%249, %c0_75, %c0_76], %252 {strides = array<i32>} : memref<8x8x128xf32, #tpu.memory_space<vmem>>, vector<1x8x128xf32>,
    %c5_i32 = arith.constant 5 : i32
    %253 = tpu.concatenate %230, %247 in 1 : vector<8x32xf32>, vector<8x64xf32> -> vector<8x96xf32>
    %c0_77 = arith.constant 0 : index
    %c0_78 = arith.constant 0 : index
    %254 = vector.load %arg2[%c0_77, %c0_78] : memref<96x256xf32, #tpu.memory_space<vmem>>, vector<96x256xf32>
    %cst_79 = arith.constant dense<0.000000e+00> : vector<8x256xf32>
    %255 = tpu.matmul %253, %254, %cst_79 {dimension_numbers = #tpu.dot_dimension_numbers<[1], [0], [0], [1], [0, 0, 1, 1], [], []>} : vector<8x96xf32>, vector<96x256xf32>, vector<8x256xf32> -> vector<8x256xf32>
    %256 = arith.addf %255, %3 : vector<8x256xf32>
    %c0_80 = arith.constant 0 : index
    %c0_81 = arith.constant 0 : index
    %257 = vector.load %arg1[%c0_80, %c0_81] : memref<32x128xf32, #tpu.memory_space<vmem>>, vector<32x128xf32>
    %cst_82 = arith.constant dense<0.000000e+00> : vector<8x128xf32>
    %258 = tpu.matmul %230, %257, %cst_82 {dimension_numbers = #tpu.dot_dimension_numbers<[1], [0], [0], [1], [0, 0, 1, 1], [], []>} : vector<8x32xf32>, vector<32x128xf32>, vector<8x128xf32> -> vector<8x128xf32>
    %259 = arith.addf %0, %258 : vector<8x128xf32>
    %cst_83 = arith.constant 5.000000e-01 : f32
    %260 = vector.broadcast %cst_83 : f32 to vector<8x128xf32>
    %261 = arith.mulf %260, %259 : vector<8x128xf32>
    %262 = math.tanh %261 : vector<8x128xf32>
    %cst_84 = arith.constant 5.000000e-01 : f32
    %263 = vector.broadcast %cst_84 : f32 to vector<8x128xf32>
    %264 = arith.mulf %263, %262 : vector<8x128xf32>
    %cst_85 = arith.constant 5.000000e-01 : f32
    %265 = vector.broadcast %cst_85 : f32 to vector<8x128xf32>
    %266 = arith.addf %264, %265 : vector<8x128xf32>
    %267 = vector.extract_strided_slice %266 {offsets = [0, 0], sizes = [8, 32], strides = [1, 1]} : vector<8x128xf32> to vector<8x32xf32>
    %268 = vector.extract_strided_slice %266 {offsets = [0, 32], sizes = [8, 32], strides = [1, 1]} : vector<8x128xf32> to vector<8x32xf32>
    %269 = vector.extract_strided_slice %259 {offsets = [0, 64], sizes = [8, 32], strides = [1, 1]} : vector<8x128xf32> to vector<8x32xf32>
    %270 = math.tanh %269 : vector<8x32xf32>
    %271 = vector.extract_strided_slice %266 {offsets = [0, 96], sizes = [8, 32], strides = [1, 1]} : vector<8x128xf32> to vector<8x32xf32>
    %272 = arith.mulf %268, %228 : vector<8x32xf32>
    %273 = arith.mulf %267, %270 : vector<8x32xf32>
    %274 = arith.addf %272, %273 : vector<8x32xf32>
    %275 = math.tanh %274 : vector<8x32xf32>
    %276 = arith.mulf %271, %275 : vector<8x32xf32>
    %cst_86 = arith.constant 5.000000e-01 : f32
    %277 = vector.broadcast %cst_86 : f32 to vector<8x256xf32>
    %278 = arith.mulf %277, %256 : vector<8x256xf32>
    %279 = math.tanh %278 : vector<8x256xf32>
    %cst_87 = arith.constant 5.000000e-01 : f32
    %280 = vector.broadcast %cst_87 : f32 to vector<8x256xf32>
    %281 = arith.mulf %280, %279 : vector<8x256xf32>
    %cst_88 = arith.constant 5.000000e-01 : f32
    %282 = vector.broadcast %cst_88 : f32 to vector<8x256xf32>
    %283 = arith.addf %281, %282 : vector<8x256xf32>
    %284 = vector.extract_strided_slice %283 {offsets = [0, 0], sizes = [8, 64], strides = [1, 1]} : vector<8x256xf32> to vector<8x64xf32>
    %285 = vector.extract_strided_slice %283 {offsets = [0, 64], sizes = [8, 64], strides = [1, 1]} : vector<8x256xf32> to vector<8x64xf32>
    %286 = vector.extract_strided_slice %256 {offsets = [0, 128], sizes = [8, 64], strides = [1, 1]} : vector<8x256xf32> to vector<8x64xf32>
    %287 = math.tanh %286 : vector<8x64xf32>
    %288 = vector.extract_strided_slice %283 {offsets = [0, 192], sizes = [8, 64], strides = [1, 1]} : vector<8x256xf32> to vector<8x64xf32>
    %289 = arith.mulf %285, %245 : vector<8x64xf32>
    %290 = arith.mulf %284, %287 : vector<8x64xf32>
    %291 = arith.addf %289, %290 : vector<8x64xf32>
    %292 = math.tanh %291 : vector<8x64xf32>
    %293 = arith.mulf %288, %292 : vector<8x64xf32>
    %294 = tpu.concatenate %293, %291 in 1 : vector<8x64xf32>, vector<8x64xf32> -> vector<8x128xf32>
    %295 = arith.index_cast %c5_i32 : i32 to index
    %c0_89 = arith.constant 0 : index
    %c0_90 = arith.constant 0 : index
    %296 = vector.load %arg4[%295, %c0_89, %c0_90] : memref<8x8x128xf32, #tpu.memory_space<vmem>>, vector<1x8x128xf32>
    %297 = vector.shape_cast %296 : vector<1x8x128xf32> to vector<8x128xf32>
    %298 = vector.shape_cast %294 : vector<8x128xf32> to vector<1x8x128xf32>
    tpu.vector_store %arg4[%295, %c0_89, %c0_90], %298 {strides = array<i32>} : memref<8x8x128xf32, #tpu.memory_space<vmem>>, vector<1x8x128xf32>,
    %c6_i32 = arith.constant 6 : i32
    %299 = tpu.concatenate %276, %293 in 1 : vector<8x32xf32>, vector<8x64xf32> -> vector<8x96xf32>
    %c0_91 = arith.constant 0 : index
    %c0_92 = arith.constant 0 : index
    %300 = vector.load %arg2[%c0_91, %c0_92] : memref<96x256xf32, #tpu.memory_space<vmem>>, vector<96x256xf32>
    %cst_93 = arith.constant dense<0.000000e+00> : vector<8x256xf32>
    %301 = tpu.matmul %299, %300, %cst_93 {dimension_numbers = #tpu.dot_dimension_numbers<[1], [0], [0], [1], [0, 0, 1, 1], [], []>} : vector<8x96xf32>, vector<96x256xf32>, vector<8x256xf32> -> vector<8x256xf32>
    %302 = arith.addf %301, %3 : vector<8x256xf32>
    %c0_94 = arith.constant 0 : index
    %c0_95 = arith.constant 0 : index
    %303 = vector.load %arg1[%c0_94, %c0_95] : memref<32x128xf32, #tpu.memory_space<vmem>>, vector<32x128xf32>
    %cst_96 = arith.constant dense<0.000000e+00> : vector<8x128xf32>
    %304 = tpu.matmul %276, %303, %cst_96 {dimension_numbers = #tpu.dot_dimension_numbers<[1], [0], [0], [1], [0, 0, 1, 1], [], []>} : vector<8x32xf32>, vector<32x128xf32>, vector<8x128xf32> -> vector<8x128xf32>
    %305 = arith.addf %0, %304 : vector<8x128xf32>
    %cst_97 = arith.constant 5.000000e-01 : f32
    %306 = vector.broadcast %cst_97 : f32 to vector<8x128xf32>
    %307 = arith.mulf %306, %305 : vector<8x128xf32>
    %308 = math.tanh %307 : vector<8x128xf32>
    %cst_98 = arith.constant 5.000000e-01 : f32
    %309 = vector.broadcast %cst_98 : f32 to vector<8x128xf32>
    %310 = arith.mulf %309, %308 : vector<8x128xf32>
    %cst_99 = arith.constant 5.000000e-01 : f32
    %311 = vector.broadcast %cst_99 : f32 to vector<8x128xf32>
    %312 = arith.addf %310, %311 : vector<8x128xf32>
    %313 = vector.extract_strided_slice %312 {offsets = [0, 0], sizes = [8, 32], strides = [1, 1]} : vector<8x128xf32> to vector<8x32xf32>
    %314 = vector.extract_strided_slice %312 {offsets = [0, 32], sizes = [8, 32], strides = [1, 1]} : vector<8x128xf32> to vector<8x32xf32>
    %315 = vector.extract_strided_slice %305 {offsets = [0, 64], sizes = [8, 32], strides = [1, 1]} : vector<8x128xf32> to vector<8x32xf32>
    %316 = math.tanh %315 : vector<8x32xf32>
    %317 = vector.extract_strided_slice %312 {offsets = [0, 96], sizes = [8, 32], strides = [1, 1]} : vector<8x128xf32> to vector<8x32xf32>
    %318 = arith.mulf %314, %274 : vector<8x32xf32>
    %319 = arith.mulf %313, %316 : vector<8x32xf32>
    %320 = arith.addf %318, %319 : vector<8x32xf32>
    %321 = math.tanh %320 : vector<8x32xf32>
    %322 = arith.mulf %317, %321 : vector<8x32xf32>
    %cst_100 = arith.constant 5.000000e-01 : f32
    %323 = vector.broadcast %cst_100 : f32 to vector<8x256xf32>
    %324 = arith.mulf %323, %302 : vector<8x256xf32>
    %325 = math.tanh %324 : vector<8x256xf32>
    %cst_101 = arith.constant 5.000000e-01 : f32
    %326 = vector.broadcast %cst_101 : f32 to vector<8x256xf32>
    %327 = arith.mulf %326, %325 : vector<8x256xf32>
    %cst_102 = arith.constant 5.000000e-01 : f32
    %328 = vector.broadcast %cst_102 : f32 to vector<8x256xf32>
    %329 = arith.addf %327, %328 : vector<8x256xf32>
    %330 = vector.extract_strided_slice %329 {offsets = [0, 0], sizes = [8, 64], strides = [1, 1]} : vector<8x256xf32> to vector<8x64xf32>
    %331 = vector.extract_strided_slice %329 {offsets = [0, 64], sizes = [8, 64], strides = [1, 1]} : vector<8x256xf32> to vector<8x64xf32>
    %332 = vector.extract_strided_slice %302 {offsets = [0, 128], sizes = [8, 64], strides = [1, 1]} : vector<8x256xf32> to vector<8x64xf32>
    %333 = math.tanh %332 : vector<8x64xf32>
    %334 = vector.extract_strided_slice %329 {offsets = [0, 192], sizes = [8, 64], strides = [1, 1]} : vector<8x256xf32> to vector<8x64xf32>
    %335 = arith.mulf %331, %291 : vector<8x64xf32>
    %336 = arith.mulf %330, %333 : vector<8x64xf32>
    %337 = arith.addf %335, %336 : vector<8x64xf32>
    %338 = math.tanh %337 : vector<8x64xf32>
    %339 = arith.mulf %334, %338 : vector<8x64xf32>
    %340 = tpu.concatenate %339, %337 in 1 : vector<8x64xf32>, vector<8x64xf32> -> vector<8x128xf32>
    %341 = arith.index_cast %c6_i32 : i32 to index
    %c0_103 = arith.constant 0 : index
    %c0_104 = arith.constant 0 : index
    %342 = vector.load %arg4[%341, %c0_103, %c0_104] : memref<8x8x128xf32, #tpu.memory_space<vmem>>, vector<1x8x128xf32>
    %343 = vector.shape_cast %342 : vector<1x8x128xf32> to vector<8x128xf32>
    %344 = vector.shape_cast %340 : vector<8x128xf32> to vector<1x8x128xf32>
    tpu.vector_store %arg4[%341, %c0_103, %c0_104], %344 {strides = array<i32>} : memref<8x8x128xf32, #tpu.memory_space<vmem>>, vector<1x8x128xf32>,
    %c7_i32 = arith.constant 7 : i32
    %345 = tpu.concatenate %322, %339 in 1 : vector<8x32xf32>, vector<8x64xf32> -> vector<8x96xf32>
    %c0_105 = arith.constant 0 : index
    %c0_106 = arith.constant 0 : index
    %346 = vector.load %arg2[%c0_105, %c0_106] : memref<96x256xf32, #tpu.memory_space<vmem>>, vector<96x256xf32>
    %cst_107 = arith.constant dense<0.000000e+00> : vector<8x256xf32>
    %347 = tpu.matmul %345, %346, %cst_107 {dimension_numbers = #tpu.dot_dimension_numbers<[1], [0], [0], [1], [0, 0, 1, 1], [], []>} : vector<8x96xf32>, vector<96x256xf32>, vector<8x256xf32> -> vector<8x256xf32>
    %348 = arith.addf %347, %3 : vector<8x256xf32>
    %c0_108 = arith.constant 0 : index
    %c0_109 = arith.constant 0 : index
    %349 = vector.load %arg1[%c0_108, %c0_109] : memref<32x128xf32, #tpu.memory_space<vmem>>, vector<32x128xf32>
    %cst_110 = arith.constant dense<0.000000e+00> : vector<8x128xf32>
    %350 = tpu.matmul %322, %349, %cst_110 {dimension_numbers = #tpu.dot_dimension_numbers<[1], [0], [0], [1], [0, 0, 1, 1], [], []>} : vector<8x32xf32>, vector<32x128xf32>, vector<8x128xf32> -> vector<8x128xf32>
    %351 = arith.addf %0, %350 : vector<8x128xf32>
    %cst_111 = arith.constant 5.000000e-01 : f32
    %352 = vector.broadcast %cst_111 : f32 to vector<8x128xf32>
    %353 = arith.mulf %352, %351 : vector<8x128xf32>
    %354 = math.tanh %353 : vector<8x128xf32>
    %cst_112 = arith.constant 5.000000e-01 : f32
    %355 = vector.broadcast %cst_112 : f32 to vector<8x128xf32>
    %356 = arith.mulf %355, %354 : vector<8x128xf32>
    %cst_113 = arith.constant 5.000000e-01 : f32
    %357 = vector.broadcast %cst_113 : f32 to vector<8x128xf32>
    %358 = arith.addf %356, %357 : vector<8x128xf32>
    %359 = vector.extract_strided_slice %358 {offsets = [0, 0], sizes = [8, 32], strides = [1, 1]} : vector<8x128xf32> to vector<8x32xf32>
    %360 = vector.extract_strided_slice %358 {offsets = [0, 32], sizes = [8, 32], strides = [1, 1]} : vector<8x128xf32> to vector<8x32xf32>
    %361 = vector.extract_strided_slice %351 {offsets = [0, 64], sizes = [8, 32], strides = [1, 1]} : vector<8x128xf32> to vector<8x32xf32>
    %362 = math.tanh %361 : vector<8x32xf32>
    %363 = vector.extract_strided_slice %358 {offsets = [0, 96], sizes = [8, 32], strides = [1, 1]} : vector<8x128xf32> to vector<8x32xf32>
    %364 = arith.mulf %360, %320 : vector<8x32xf32>
    %365 = arith.mulf %359, %362 : vector<8x32xf32>
    %366 = arith.addf %364, %365 : vector<8x32xf32>
    %367 = math.tanh %366 : vector<8x32xf32>
    %368 = arith.mulf %363, %367 : vector<8x32xf32>
    %cst_114 = arith.constant 5.000000e-01 : f32
    %369 = vector.broadcast %cst_114 : f32 to vector<8x256xf32>
    %370 = arith.mulf %369, %348 : vector<8x256xf32>
    %371 = math.tanh %370 : vector<8x256xf32>
    %cst_115 = arith.constant 5.000000e-01 : f32
    %372 = vector.broadcast %cst_115 : f32 to vector<8x256xf32>
    %373 = arith.mulf %372, %371 : vector<8x256xf32>
    %cst_116 = arith.constant 5.000000e-01 : f32
    %374 = vector.broadcast %cst_116 : f32 to vector<8x256xf32>
    %375 = arith.addf %373, %374 : vector<8x256xf32>
    %376 = vector.extract_strided_slice %375 {offsets = [0, 0], sizes = [8, 64], strides = [1, 1]} : vector<8x256xf32> to vector<8x64xf32>
    %377 = vector.extract_strided_slice %375 {offsets = [0, 64], sizes = [8, 64], strides = [1, 1]} : vector<8x256xf32> to vector<8x64xf32>
    %378 = vector.extract_strided_slice %348 {offsets = [0, 128], sizes = [8, 64], strides = [1, 1]} : vector<8x256xf32> to vector<8x64xf32>
    %379 = math.tanh %378 : vector<8x64xf32>
    %380 = vector.extract_strided_slice %375 {offsets = [0, 192], sizes = [8, 64], strides = [1, 1]} : vector<8x256xf32> to vector<8x64xf32>
    %381 = arith.mulf %377, %337 : vector<8x64xf32>
    %382 = arith.mulf %376, %379 : vector<8x64xf32>
    %383 = arith.addf %381, %382 : vector<8x64xf32>
    %384 = math.tanh %383 : vector<8x64xf32>
    %385 = arith.mulf %380, %384 : vector<8x64xf32>
    %386 = tpu.concatenate %385, %383 in 1 : vector<8x64xf32>, vector<8x64xf32> -> vector<8x128xf32>
    %387 = arith.index_cast %c7_i32 : i32 to index
    %c0_117 = arith.constant 0 : index
    %c0_118 = arith.constant 0 : index
    %388 = vector.load %arg4[%387, %c0_117, %c0_118] : memref<8x8x128xf32, #tpu.memory_space<vmem>>, vector<1x8x128xf32>
    %389 = vector.shape_cast %388 : vector<1x8x128xf32> to vector<8x128xf32>
    %390 = vector.shape_cast %386 : vector<8x128xf32> to vector<1x8x128xf32>
    tpu.vector_store %arg4[%387, %c0_117, %c0_118], %390 {strides = array<i32>} : memref<8x8x128xf32, #tpu.memory_space<vmem>>, vector<1x8x128xf32>,
    %c8_i32 = arith.constant 8 : i32
    return
  }
}

</mosaic_0001>

<llo_original>
// kernel: decoder_forward.1
$region0: #{decoder_forward.1}
  #allocation0 [shape = 'u32[]', space=smem, size = 0x4, offset = 0x4, fixed_abs, tag = 'smem constant byte address 0x4 - core index']
  #allocation1 [shape = 'u32[144,128]{1,0:T(1,128)}', space=vmem, size = 0x12000, scoped, tag = 'internal scratch']
  %s0 = inlined_call_operand.vmem [shape: f32[8,128], index: 0, kind: input, shape index: {}]
  %s1 = inlined_call_operand.vmem [shape: f32[32,128], index: 1, kind: input, shape index: {}]
  %s2 = inlined_call_operand.vmem [shape: f32[96,256], index: 2, kind: input, shape index: {}]
  %s3 = inlined_call_operand.vmem [shape: f32[1,256], index: 3, kind: input, shape index: {}]
  %s4 = inlined_call_operand.vmem [shape: f32[8,8,128], index: 4, kind: output, shape index: {}]
  %s5 = sld [smem:[#allocation0]]
  $region26: #{decoder_forward.1} parent=0
    _
  %s7 = ssub.s32 1, %s5
  %s8 = scalar_select 0, %s7, %s5
  // Predicated region
  $region2: #{decoder_forward.1} parent=0 // pred_check
    _
  $region3: #{decoder_forward.1} parent=0 // pred_check_branch
    %10 = sbr.rel (0) target = $region5
  $region4: #{decoder_forward.1} parent=0 // pred_region
    _
  $region5: #{decoder_forward.1} parent=0 // pred_fallthru
    _
  // Predicated region
  $region6: #{decoder_forward.1} parent=0 // pred_check
    _
  $region7: #{decoder_forward.1} parent=0 // pred_check_branch
    %12 = sbr.rel (0) target = $region9
  $region8: #{decoder_forward.1} parent=0 // pred_region
    _
  $region9: #{decoder_forward.1} parent=0 // pred_fallthru
    _
  // Predicated region
  $region10: #{decoder_forward.1} parent=0 // pred_check
    _
  $region11: #{decoder_forward.1} parent=0 // pred_check_branch
    %14 = sbr.rel (0) target = $region13
  $region12: #{decoder_forward.1} parent=0 // pred_region
    _
  $region13: #{decoder_forward.1} parent=0 // pred_fallthru
    _
  // Predicated region
  $region14: #{decoder_forward.1} parent=0 // pred_check
    _
  $region15: #{decoder_forward.1} parent=0 // pred_check_branch
    %16 = sbr.rel (0) target = $region17
  $region16: #{decoder_forward.1} parent=0 // pred_region
    _
  $region17: #{decoder_forward.1} parent=0 // pred_fallthru
    _
  %v17 = vld [vmem:[%s0] sm:$0xff]
  %v18 = vld [vmem:[%s3] sm:$0x3]
  %v20 = vlaneseq
  %v21 = vshrl.u32 %v20, 7
  %v22 = vsub.s32 0, %v21
  %v23 = vrot.slane %v18, %v22
  %v24 = vlaneseq
  %v25 = vshrl.u32 %v24, 7
  %v26 = vsub.s32 1, %v25
  %v27 = vrot.slane %v18, %v26
  %v30 = vmul.f32 %v17, 0.5
  %v31 = vtanh.pop %v30
  %v32 = vmul.f32 %v31, 0.5
  %v33 = vadd.f32 %v32, 0.5
  %v34 = vtanh.pop %v17
  %v35 = vmul.f32 %v33, 0.0
  %37 = vrot.lane.b32.xlu0 %v34, 64
  %v38 = vpop.permute.xlu0 %37
  %v40 = vmul.f32 %v33, %v38
  %42 = vrot.lane.b32.xlu0 %v40, 32
  %v43 = vpop.permute.xlu0 %42
  %v45 = vadd.f32 %v35, %v43
  %v46 = vtanh.pop %v45
  %48 = vrot.lane.b32.xlu0 %v46, 64
  %v49 = vpop.permute.xlu0 %48
  %v51 = vmul.f32 %v33, %v49
  %53 = vrot.lane.b32.xlu0 %v51, 32
  %v54 = vpop.permute.xlu0 %53
  %vm56 = vcmask 261120
  %v57 = vsel %vm56, %v54, 0.0
  %v58 = vld [vmem:[%s2] sm:$0xff]
  %v59 = vld [vmem:[%s2 + $0x8] sm:$0xff]
  %v60 = vld [vmem:[%s2 + $0x10] sm:$0xff]
  %v61 = vld [vmem:[%s2 + $0x18] sm:$0xff]
  %v62 = vld [vmem:[%s2 + $0x20] sm:$0xff]
  %v63 = vld [vmem:[%s2 + $0x28] sm:$0xff]
  %v64 = vld [vmem:[%s2 + $0x30] sm:$0xff]
  %v65 = vld [vmem:[%s2 + $0x38] sm:$0xff]
  %v66 = vld [vmem:[%s2 + $0x40] sm:$0xff]
  %v67 = vld [vmem:[%s2 + $0x48] sm:$0xff]
  %v68 = vld [vmem:[%s2 + $0x50] sm:$0xff]
  %v69 = vld [vmem:[%s2 + $0x58] sm:$0xff]
  %v70 = vld [vmem:[%s2 + $0x60] sm:$0xff]
  %v71 = vld [vmem:[%s2 + $0x68] sm:$0xff]
  %v72 = vld [vmem:[%s2 + $0x70] sm:$0xff]
  %v73 = vld [vmem:[%s2 + $0x78] sm:$0xff]
  %v74 = vld [vmem:[%s2 + $0x80] sm:$0xff]
  %v75 = vld [vmem:[%s2 + $0x88] sm:$0xff]
  %v76 = vld [vmem:[%s2 + $0x90] sm:$0xff]
  %v77 = vld [vmem:[%s2 + $0x98] sm:$0xff]
  %v78 = vld [vmem:[%s2 + $0xa0] sm:$0xff]
  %v79 = vld [vmem:[%s2 + $0xa8] sm:$0xff]
  %v80 = vld [vmem:[%s2 + $0xb0] sm:$0xff]
  %v81 = vld [vmem:[%s2 + $0xb8] sm:$0xff]
  %vm82 = vcmask 785408
  %v84 = vsel %vm82, %v57, 0
  %86 = vmatprep.subr.mxu0 %v59
  %87 = vmatpush1.msra.mxu0 %v58
  %88 = vmatprep.subr.mxu0 %v61
  %89 = vmatpush1.msra.mxu0 %v60
  %90 = vmatprep.subr.mxu0 %v63
  %91 = vmatpush1.msra.mxu0 %v62
  %92 = vmatprep.subr.mxu0 %v65
  %93 = vmatpush1.msra.mxu0 %v64
  %94 = vmatprep.subr.mxu0 %v67
  %95 = vmatpush1.msra.mxu0 %v66
  %96 = vmatprep.subr.mxu0 %v69
  %97 = vmatpush1.msra.mxu0 %v68
  %98 = vmatprep.subr.mxu0 %v71
  %99 = vmatpush1.msra.mxu0 %v70
  %100 = vmatprep.subr.mxu0 %v73
  %101 = vmatpush1.msra.mxu0 %v72
  %102 = vmatprep.subr.mxu0 %v75
  %103 = vmatpush1.msra.mxu0 %v74
  %104 = vmatprep.subr.mxu0 %v77
  %105 = vmatpush1.msra.mxu0 %v76
  %106 = vmatprep.subr.mxu0 %v79
  %107 = vmatpush1.msra.mxu0 %v78
  %108 = vmatprep.subr.mxu0 %v81
  %109 = vmatpush1.msra.mxu0 %v80
  %110 = vmatprep.subr.mxu0 0.0
  %111 = vmatpush1.msra.mxu0 0.0
  %112 = vmatprep.subr.mxu0 0.0
  %113 = vmatpush1.msra.mxu0 0.0
  %114 = vmatprep.subr.mxu0 0.0
  %115 = vmatpush1.msra.mxu0 0.0
  %116 = vmatprep.subr.mxu0 0.0
  %117 = vmatpush1.msra.mxu0 0.0
  %118 = vmatprep.subr.mxu0 0.0
  %119 = vmatpush1.msra.mxu0 0.0
  %120 = vmatprep.subr.mxu0 0.0
  %121 = vmatpush1.msra.mxu0 0.0
  %122 = vmatprep.subr.mxu0 0.0
  %123 = vmatpush1.msra.mxu0 0.0
  %124 = vmatprep.subr.mxu0 0.0
  %125 = vmatpush1.msra.mxu0 0.0
  %126 = vmatprep.subr.mxu0 0.0
  %127 = vmatpush1.msra.mxu0 0.0
  %128 = vmatprep.subr.mxu0 0.0
  %129 = vmatpush1.msra.mxu0 0.0
  %130 = vmatprep.subr.mxu0 0.0
  %131 = vmatpush1.msra.mxu0 0.0
  %132 = vmatprep.subr.mxu0 0.0
  %133 = vmatpush1.msra.mxu0 0.0
  %134 = vmatprep.subr.mxu0 0.0
  %135 = vmatpush1.msra.mxu0 0.0
  %136 = vmatprep.subr.mxu0 0.0
  %137 = vmatpush1.msra.mxu0 0.0
  %138 = vmatprep.subr.mxu0 0.0
  %139 = vmatpush1.msra.mxu0 0.0
  %140 = vmatprep.subr.mxu0 0.0
  %141 = vmatpush1.msra.mxu0 0.0
  %142 = vmatprep.subr.mxu0 0.0
  %143 = vmatpush1.msra.mxu0 0.0
  %144 = vmatprep.subr.mxu0 0.0
  %145 = vmatpush1.msra.mxu0 0.0
  %146 = vmatprep.subr.mxu0 0.0
  %147 = vmatpush1.msra.mxu0 0.0
  %148 = vmatprep.subr.mxu0 0.0
  %149 = vmatpush1.msra.mxu0 0.0
  %150 = vmatprep.mubr.f32.mxu0 0.0
  %151 = vmatmul.mubr.f32.gmra.mrb[0].mxu0 %v84
  %v152 = vpop.f32.mrb[0].mxu0
  %v153 = vadd.f32 %v23, %v152
  %v154 = vpop.f32.mrb[0].mxu0
  %v155 = vadd.f32 %v27, %v154
  %156 = vdwg.mxu0
  %v157 = vld [vmem:[%s1] sm:$0xff]
  %v158 = vld [vmem:[%s1 + $0x8] sm:$0xff]
  %v159 = vld [vmem:[%s1 + $0x10] sm:$0xff]
  %v160 = vld [vmem:[%s1 + $0x18] sm:$0xff]
  %v161 = vsel %vm56, %v54, 0
  %163 = vmatprep.subr.mxu0 0.0
  %164 = vmatpush1.msra.mxu0 %v157
  %165 = vmatprep.subr.mxu0 0.0
  %166 = vmatpush1.msra.mxu0 %v158
  %167 = vmatprep.subr.mxu0 0.0
  %168 = vmatpush1.msra.mxu0 %v159
  %169 = vmatprep.subr.mxu0 0.0
  %170 = vmatpush1.msra.mxu0 %v160
  %171 = vmatprep.subr.mxu0 0.0
  %172 = vmatpush1.msra.mxu0 0.0
  %173 = vmatprep.subr.mxu0 0.0
  %174 = vmatpush1.msra.mxu0 0.0
  %175 = vmatprep.subr.mxu0 0.0
  %176 = vmatpush1.msra.mxu0 0.0
  %177 = vmatprep.subr.mxu0 0.0
  %178 = vmatpush1.msra.mxu0 0.0
  %179 = vmatprep.subr.mxu0 0.0
  %180 = vmatpush1.msra.mxu0 0.0
  %181 = vmatprep.subr.mxu0 0.0
  %182 = vmatpush1.msra.mxu0 0.0
  %183 = vmatprep.subr.mxu0 0.0
  %184 = vmatpush1.msra.mxu0 0.0
  %185 = vmatprep.subr.mxu0 0.0
  %186 = vmatpush1.msra.mxu0 0.0
  %187 = vmatprep.subr.mxu0 0.0
  %188 = vmatpush1.msra.mxu0 0.0
  %189 = vmatprep.subr.mxu0 0.0
  %190 = vmatpush1.msra.mxu0 0.0
  %191 = vmatprep.subr.mxu0 0.0
  %192 = vmatpush1.msra.mxu0 0.0
  %193 = vmatprep.subr.mxu0 0.0
  %194 = vmatpush1.msra.mxu0 0.0
  %195 = vmatprep.subr.mxu0 0.0
  %196 = vmatpush1.msra.mxu0 0.0
  %197 = vmatprep.subr.mxu0 0.0
  %198 = vmatpush1.msra.mxu0 0.0
  %199 = vmatprep.subr.mxu0 0.0
  %200 = vmatpush1.msra.mxu0 0.0
  %201 = vmatprep.subr.mxu0 0.0
  %202 = vmatpush1.msra.mxu0 0.0
  %203 = vmatprep.subr.mxu0 0.0
  %204 = vmatpush1.msra.mxu0 0.0
  %205 = vmatprep.subr.mxu0 0.0
  %206 = vmatpush1.msra.mxu0 0.0
  %207 = vmatprep.subr.mxu0 0.0
  %208 = vmatpush1.msra.mxu0 0.0
  %209 = vmatprep.subr.mxu0 0.0
  %210 = vmatpush1.msra.mxu0 0.0
  %211 = vmatprep.subr.mxu0 0.0
  %212 = vmatpush1.msra.mxu0 0.0
  %213 = vmatprep.subr.mxu0 0.0
  %214 = vmatpush1.msra.mxu0 0.0
  %215 = vmatprep.subr.mxu0 0.0
  %216 = vmatpush1.msra.mxu0 0.0
  %217 = vmatprep.subr.mxu0 0.0
  %218 = vmatpush1.msra.mxu0 0.0
  %219 = vmatprep.subr.mxu0 0.0
  %220 = vmatpush1.msra.mxu0 0.0
  %221 = vmatprep.subr.mxu0 0.0
  %222 = vmatpush1.msra.mxu0 0.0
  %223 = vmatprep.subr.mxu0 0.0
  %224 = vmatpush1.msra.mxu0 0.0
  %225 = vmatprep.subr.mxu0 0.0
  %226 = vmatpush1.msra.mxu0 0.0
  %227 = vmatprep.mubr.f32.mxu0 0.0
  %228 = vmatmul.mubr.f32.gmra.mrb[0].mxu0 %v161
  %v229 = vpop.f32.mrb[0].mxu0
  %v230 = vadd.f32 0.0, %v229
  %v231 = vpop.f32.mrb[0].mxu0
  %232 = vdwg.mxu0
  %v233 = vadd.f32 %v17, %v230
  %v234 = vmul.f32 %v233, 0.5
  %v235 = vtanh.pop %v234
  %v236 = vmul.f32 %v235, 0.5
  %v237 = vadd.f32 %v236, 0.5
  %v238 = vtanh.pop %v233
  %v239 = vmul.f32 %v237, %v45
  %241 = vrot.lane.b32.xlu0 %v238, 64
  %v242 = vpop.permute.xlu0 %241
  %v244 = vmul.f32 %v237, %v242
  %246 = vrot.lane.b32.xlu0 %v244, 32
  %v247 = vpop.permute.xlu0 %246
  %v249 = vadd.f32 %v239, %v247
  %v250 = vtanh.pop %v249
  %252 = vrot.lane.b32.xlu0 %v250, 64
  %v253 = vpop.permute.xlu0 %252
  %v255 = vmul.f32 %v237, %v253
  %v256 = vmul.f32 %v153, 0.5
  %v257 = vmul.f32 %v155, 0.5
  %v258 = vtanh.pop %v256
  %v259 = vtanh.pop %v257
  %v260 = vmul.f32 %v258, 0.5
  %v261 = vmul.f32 %v259, 0.5
  %v262 = vadd.f32 %v260, 0.5
  %v263 = vadd.f32 %v261, 0.5
  %v264 = vtanh.pop %v155
  %v265 = vmul.f32 %v262, 0.0
  %v266 = vmul.f32 %v262, %v264
  %268 = vrot.lane.b32.xlu0 %v266, 64
  %v269 = vpop.permute.xlu0 %268
  %v271 = vadd.f32 %v265, %v269
  %v272 = vtanh.pop %v271
  %v273 = vmul.f32 %v263, %v272
  %275 = vrot.lane.b32.xlu0 %v273, 64
  %v276 = vpop.permute.xlu0 %275
  %vm278 = vcmask 523264
  %v279 = vsel %vm278, %v276, %v271
  %280 = vst [vmem:[%s4] sm:$0xff] %v279
  %282 = vrot.lane.b32.xlu0 %v255, 32
  %v283 = vpop.permute.xlu0 %282
  %285 = vrot.lane.b32.xlu0 %v273, 96
  %v286 = vpop.permute.xlu0 %285
  %v288 = vsel %vm56, %v283, %v286
  %v289 = vld [vmem:[%s2] sm:$0xff]
  %v290 = vld [vmem:[%s2 + $0x8] sm:$0xff]
  %v291 = vld [vmem:[%s2 + $0x10] sm:$0xff]
  %v292 = vld [vmem:[%s2 + $0x18] sm:$0xff]
  %v293 = vld [vmem:[%s2 + $0x20] sm:$0xff]
  %v294 = vld [vmem:[%s2 + $0x28] sm:$0xff]
  %v295 = vld [vmem:[%s2 + $0x30] sm:$0xff]
  %v296 = vld [vmem:[%s2 + $0x38] sm:$0xff]
  %v297 = vld [vmem:[%s2 + $0x40] sm:$0xff]
  %v298 = vld [vmem:[%s2 + $0x48] sm:$0xff]
  %v299 = vld [vmem:[%s2 + $0x50] sm:$0xff]
  %v300 = vld [vmem:[%s2 + $0x58] sm:$0xff]
  %v301 = vld [vmem:[%s2 + $0x60] sm:$0xff]
  %v302 = vld [vmem:[%s2 + $0x68] sm:$0xff]
  %v303 = vld [vmem:[%s2 + $0x70] sm:$0xff]
  %v304 = vld [vmem:[%s2 + $0x78] sm:$0xff]
  %v305 = vld [vmem:[%s2 + $0x80] sm:$0xff]
  %v306 = vld [vmem:[%s2 + $0x88] sm:$0xff]
  %v307 = vld [vmem:[%s2 + $0x90] sm:$0xff]
  %v308 = vld [vmem:[%s2 + $0x98] sm:$0xff]
  %v309 = vld [vmem:[%s2 + $0xa0] sm:$0xff]
  %v310 = vld [vmem:[%s2 + $0xa8] sm:$0xff]
  %v311 = vld [vmem:[%s2 + $0xb0] sm:$0xff]
  %v312 = vld [vmem:[%s2 + $0xb8] sm:$0xff]
  %v314 = vsel %vm82, %v288, 0
  %316 = vmatprep.subr.mxu0 %v290
  %317 = vmatpush1.msra.mxu0 %v289
  %318 = vmatprep.subr.mxu0 %v292
  %319 = vmatpush1.msra.mxu0 %v291
  %320 = vmatprep.subr.mxu0 %v294
  %321 = vmatpush1.msra.mxu0 %v293
  %322 = vmatprep.subr.mxu0 %v296
  %323 = vmatpush1.msra.mxu0 %v295
  %324 = vmatprep.subr.mxu0 %v298
  %325 = vmatpush1.msra.mxu0 %v297
  %326 = vmatprep.subr.mxu0 %v300
  %327 = vmatpush1.msra.mxu0 %v299
  %328 = vmatprep.subr.mxu0 %v302
  %329 = vmatpush1.msra.mxu0 %v301
  %330 = vmatprep.subr.mxu0 %v304
  %331 = vmatpush1.msra.mxu0 %v303
  %332 = vmatprep.subr.mxu0 %v306
  %333 = vmatpush1.msra.mxu0 %v305
  %334 = vmatprep.subr.mxu0 %v308
  %335 = vmatpush1.msra.mxu0 %v307
  %336 = vmatprep.subr.mxu0 %v310
  %337 = vmatpush1.msra.mxu0 %v309
  %338 = vmatprep.subr.mxu0 %v312
  %339 = vmatpush1.msra.mxu0 %v311
  %340 = vmatprep.subr.mxu0 0.0
  %341 = vmatpush1.msra.mxu0 0.0
  %342 = vmatprep.subr.mxu0 0.0
  %343 = vmatpush1.msra.mxu0 0.0
  %344 = vmatprep.subr.mxu0 0.0
  %345 = vmatpush1.msra.mxu0 0.0
  %346 = vmatprep.subr.mxu0 0.0
  %347 = vmatpush1.msra.mxu0 0.0
  %348 = vmatprep.subr.mxu0 0.0
  %349 = vmatpush1.msra.mxu0 0.0
  %350 = vmatprep.subr.mxu0 0.0
  %351 = vmatpush1.msra.mxu0 0.0
  %352 = vmatprep.subr.mxu0 0.0
  %353 = vmatpush1.msra.mxu0 0.0
  %354 = vmatprep.subr.mxu0 0.0
  %355 = vmatpush1.msra.mxu0 0.0
  %356 = vmatprep.subr.mxu0 0.0
  %357 = vmatpush1.msra.mxu0 0.0
  %358 = vmatprep.subr.mxu0 0.0
  %359 = vmatpush1.msra.mxu0 0.0
  %360 = vmatprep.subr.mxu0 0.0
  %361 = vmatpush1.msra.mxu0 0.0
  %362 = vmatprep.subr.mxu0 0.0
  %363 = vmatpush1.msra.mxu0 0.0
  %364 = vmatprep.subr.mxu0 0.0
  %365 = vmatpush1.msra.mxu0 0.0
  %366 = vmatprep.subr.mxu0 0.0
  %367 = vmatpush1.msra.mxu0 0.0
  %368 = vmatprep.subr.mxu0 0.0
  %369 = vmatpush1.msra.mxu0 0.0
  %370 = vmatprep.subr.mxu0 0.0
  %371 = vmatpush1.msra.mxu0 0.0
  %372 = vmatprep.subr.mxu0 0.0
  %373 = vmatpush1.msra.mxu0 0.0
  %374 = vmatprep.subr.mxu0 0.0
  %375 = vmatpush1.msra.mxu0 0.0
  %376 = vmatprep.subr.mxu0 0.0
  %377 = vmatpush1.msra.mxu0 0.0
  %378 = vmatprep.subr.mxu0 0.0
  %379 = vmatpush1.msra.mxu0 0.0
  %380 = vmatprep.mubr.f32.mxu0 0.0
  %381 = vmatmul.mubr.f32.gmra.mrb[0].mxu0 %v314
  %v382 = vpop.f32.mrb[0].mxu0
  %v383 = vadd.f32 %v23, %v382
  %v384 = vpop.f32.mrb[0].mxu0
  %v385 = vadd.f32 %v27, %v384
  %386 = vdwg.mxu0
  %v387 = vld [vmem:[%s1] sm:$0xff]
  %v388 = vld [vmem:[%s1 + $0x8] sm:$0xff]
  %v389 = vld [vmem:[%s1 + $0x10] sm:$0xff]
  %v390 = vld [vmem:[%s1 + $0x18] sm:$0xff]
  %v391 = vsel %vm56, %v283, 0
  %393 = vmatprep.subr.mxu0 0.0
  %394 = vmatpush1.msra.mxu0 %v387
  %395 = vmatprep.subr.mxu0 0.0
  %396 = vmatpush1.msra.mxu0 %v388
  %397 = vmatprep.subr.mxu0 0.0
  %398 = vmatpush1.msra.mxu0 %v389
  %399 = vmatprep.subr.mxu0 0.0
  %400 = vmatpush1.msra.mxu0 %v390
  %401 = vmatprep.subr.mxu0 0.0
  %402 = vmatpush1.msra.mxu0 0.0
  %403 = vmatprep.subr.mxu0 0.0
  %404 = vmatpush1.msra.mxu0 0.0
  %405 = vmatprep.subr.mxu0 0.0
  %406 = vmatpush1.msra.mxu0 0.0
  %407 = vmatprep.subr.mxu0 0.0
  %408 = vmatpush1.msra.mxu0 0.0
  %409 = vmatprep.subr.mxu0 0.0
  %410 = vmatpush1.msra.mxu0 0.0
  %411 = vmatprep.subr.mxu0 0.0
  %412 = vmatpush1.msra.mxu0 0.0
  %413 = vmatprep.subr.mxu0 0.0
  %414 = vmatpush1.msra.mxu0 0.0
  %415 = vmatprep.subr.mxu0 0.0
  %416 = vmatpush1.msra.mxu0 0.0
  %417 = vmatprep.subr.mxu0 0.0
  %418 = vmatpush1.msra.mxu0 0.0
  %419 = vmatprep.subr.mxu0 0.0
  %420 = vmatpush1.msra.mxu0 0.0
  %421 = vmatprep.subr.mxu0 0.0
  %422 = vmatpush1.msra.mxu0 0.0
  %423 = vmatprep.subr.mxu0 0.0
  %424 = vmatpush1.msra.mxu0 0.0
  %425 = vmatprep.subr.mxu0 0.0
  %426 = vmatpush1.msra.mxu0 0.0
  %427 = vmatprep.subr.mxu0 0.0
  %428 = vmatpush1.msra.mxu0 0.0
  %429 = vmatprep.subr.mxu0 0.0
  %430 = vmatpush1.msra.mxu0 0.0
  %431 = vmatprep.subr.mxu0 0.0
  %432 = vmatpush1.msra.mxu0 0.0
  %433 = vmatprep.subr.mxu0 0.0
  %434 = vmatpush1.msra.mxu0 0.0
  %435 = vmatprep.subr.mxu0 0.0
  %436 = vmatpush1.msra.mxu0 0.0
  %437 = vmatprep.subr.mxu0 0.0
  %438 = vmatpush1.msra.mxu0 0.0
  %439 = vmatprep.subr.mxu0 0.0
  %440 = vmatpush1.msra.mxu0 0.0
  %441 = vmatprep.subr.mxu0 0.0
  %442 = vmatpush1.msra.mxu0 0.0
  %443 = vmatprep.subr.mxu0 0.0
  %444 = vmatpush1.msra.mxu0 0.0
  %445 = vmatprep.subr.mxu0 0.0
  %446 = vmatpush1.msra.mxu0 0.0
  %447 = vmatprep.subr.mxu0 0.0
  %448 = vmatpush1.msra.mxu0 0.0
  %449 = vmatprep.subr.mxu0 0.0
  %450 = vmatpush1.msra.mxu0 0.0
  %451 = vmatprep.subr.mxu0 0.0
  %452 = vmatpush1.msra.mxu0 0.0
  %453 = vmatprep.subr.mxu0 0.0
  %454 = vmatpush1.msra.mxu0 0.0
  %455 = vmatprep.subr.mxu0 0.0
  %456 = vmatpush1.msra.mxu0 0.0
  %457 = vmatprep.mubr.f32.mxu0 0.0
  %458 = vmatmul.mubr.f32.gmra.mrb[0].mxu0 %v391
  %v459 = vpop.f32.mrb[0].mxu0
  %v460 = vadd.f32 0.0, %v459
  %v461 = vpop.f32.mrb[0].mxu0
  %462 = vdwg.mxu0
  %v463 = vadd.f32 %v17, %v460
  %v464 = vmul.f32 %v463, 0.5
  %v465 = vtanh.pop %v464
  %v466 = vmul.f32 %v465, 0.5
  %v467 = vadd.f32 %v466, 0.5
  %v468 = vtanh.pop %v463
  %v469 = vmul.f32 %v467, %v249
  %471 = vrot.lane.b32.xlu0 %v468, 64
  %v472 = vpop.permute.xlu0 %471
  %v474 = vmul.f32 %v467, %v472
  %476 = vrot.lane.b32.xlu0 %v474, 32
  %v477 = vpop.permute.xlu0 %476
  %v479 = vadd.f32 %v469, %v477
  %v480 = vtanh.pop %v479
  %482 = vrot.lane.b32.xlu0 %v480, 64
  %v483 = vpop.permute.xlu0 %482
  %v485 = vmul.f32 %v467, %v483
  %v486 = vmul.f32 %v383, 0.5
  %v487 = vmul.f32 %v385, 0.5
  %v488 = vtanh.pop %v486
  %v489 = vtanh.pop %v487
  %v490 = vmul.f32 %v488, 0.5
  %v491 = vmul.f32 %v489, 0.5
  %v492 = vadd.f32 %v490, 0.5
  %v493 = vadd.f32 %v491, 0.5
  %v494 = vtanh.pop %v385
  %v495 = vmul.f32 %v492, %v271
  %v496 = vmul.f32 %v492, %v494
  %498 = vrot.lane.b32.xlu0 %v496, 64
  %v499 = vpop.permute.xlu0 %498
  %v501 = vadd.f32 %v495, %v499
  %v502 = vtanh.pop %v501
  %v503 = vmul.f32 %v493, %v502
  %505 = vrot.lane.b32.xlu0 %v503, 64
  %v506 = vpop.permute.xlu0 %505
  %v508 = vsel %vm278, %v506, %v501
  %s509 = scalar_lea.vmem %s4, 8
  %510 = vst [vmem:[%s509] sm:$0xff] %v508
  %512 = vrot.lane.b32.xlu0 %v485, 32
  %v513 = vpop.permute.xlu0 %512
  %515 = vrot.lane.b32.xlu0 %v503, 96
  %v516 = vpop.permute.xlu0 %515
  %v518 = vsel %vm56, %v513, %v516
  %v519 = vld [vmem:[%s2] sm:$0xff]
  %v520 = vld [vmem:[%s2 + $0x8] sm:$0xff]
  %v521 = vld [vmem:[%s2 + $0x10] sm:$0xff]
  %v522 = vld [vmem:[%s2 + $0x18] sm:$0xff]
  %v523 = vld [vmem:[%s2 + $0x20] sm:$0xff]
  %v524 = vld [vmem:[%s2 + $0x28] sm:$0xff]
  %v525 = vld [vmem:[%s2 + $0x30] sm:$0xff]
  %v526 = vld [vmem:[%s2 + $0x38] sm:$0xff]
  %v527 = vld [vmem:[%s2 + $0x40] sm:$0xff]
  %v528 = vld [vmem:[%s2 + $0x48] sm:$0xff]
  %v529 = vld [vmem:[%s2 + $0x50] sm:$0xff]
  %v530 = vld [vmem:[%s2 + $0x58] sm:$0xff]
  %v531 = vld [vmem:[%s2 + $0x60] sm:$0xff]
  %v532 = vld [vmem:[%s2 + $0x68] sm:$0xff]
  %v533 = vld [vmem:[%s2 + $0x70] sm:$0xff]
  %v534 = vld [vmem:[%s2 + $0x78] sm:$0xff]
  %v535 = vld [vmem:[%s2 + $0x80] sm:$0xff]
  %v536 = vld [vmem:[%s2 + $0x88] sm:$0xff]
  %v537 = vld [vmem:[%s2 + $0x90] sm:$0xff]
  %v538 = vld [vmem:[%s2 + $0x98] sm:$0xff]
  %v539 = vld [vmem:[%s2 + $0xa0] sm:$0xff]
  %v540 = vld [vmem:[%s2 + $0xa8] sm:$0xff]
  %v541 = vld [vmem:[%s2 + $0xb0] sm:$0xff]
  %v542 = vld [vmem:[%s2 + $0xb8] sm:$0xff]
  %v544 = vsel %vm82, %v518, 0
  %546 = vmatprep.subr.mxu0 %v520
  %547 = vmatpush1.msra.mxu0 %v519
  %548 = vmatprep.subr.mxu0 %v522
  %549 = vmatpush1.msra.mxu0 %v521
  %550 = vmatprep.subr.mxu0 %v524
  %551 = vmatpush1.msra.mxu0 %v523
  %552 = vmatprep.subr.mxu0 %v526
  %553 = vmatpush1.msra.mxu0 %v525
  %554 = vmatprep.subr.mxu0 %v528
  %555 = vmatpush1.msra.mxu0 %v527
  %556 = vmatprep.subr.mxu0 %v530
  %557 = vmatpush1.msra.mxu0 %v529
  %558 = vmatprep.subr.mxu0 %v532
  %559 = vmatpush1.msra.mxu0 %v531
  %560 = vmatprep.subr.mxu0 %v534
  %561 = vmatpush1.msra.mxu0 %v533
  %562 = vmatprep.subr.mxu0 %v536
  %563 = vmatpush1.msra.mxu0 %v535
  %564 = vmatprep.subr.mxu0 %v538
  %565 = vmatpush1.msra.mxu0 %v537
  %566 = vmatprep.subr.mxu0 %v540
  %567 = vmatpush1.msra.mxu0 %v539
  %568 = vmatprep.subr.mxu0 %v542
  %569 = vmatpush1.msra.mxu0 %v541
  %570 = vmatprep.subr.mxu0 0.0
  %571 = vmatpush1.msra.mxu0 0.0
  %572 = vmatprep.subr.mxu0 0.0
  %573 = vmatpush1.msra.mxu0 0.0
  %574 = vmatprep.subr.mxu0 0.0
  %575 = vmatpush1.msra.mxu0 0.0
  %576 = vmatprep.subr.mxu0 0.0
  %577 = vmatpush1.msra.mxu0 0.0
  %578 = vmatprep.subr.mxu0 0.0
  %579 = vmatpush1.msra.mxu0 0.0
  %580 = vmatprep.subr.mxu0 0.0
  %581 = vmatpush1.msra.mxu0 0.0
  %582 = vmatprep.subr.mxu0 0.0
  %583 = vmatpush1.msra.mxu0 0.0
  %584 = vmatprep.subr.mxu0 0.0
  %585 = vmatpush1.msra.mxu0 0.0
  %586 = vmatprep.subr.mxu0 0.0
  %587 = vmatpush1.msra.mxu0 0.0
  %588 = vmatprep.subr.mxu0 0.0
  %589 = vmatpush1.msra.mxu0 0.0
  %590 = vmatprep.subr.mxu0 0.0
  %591 = vmatpush1.msra.mxu0 0.0
  %592 = vmatprep.subr.mxu0 0.0
  %593 = vmatpush1.msra.mxu0 0.0
  %594 = vmatprep.subr.mxu0 0.0
  %595 = vmatpush1.msra.mxu0 0.0
  %596 = vmatprep.subr.mxu0 0.0
  %597 = vmatpush1.msra.mxu0 0.0
  %598 = vmatprep.subr.mxu0 0.0
  %599 = vmatpush1.msra.mxu0 0.0
  %600 = vmatprep.subr.mxu0 0.0
  %601 = vmatpush1.msra.mxu0 0.0
  %602 = vmatprep.subr.mxu0 0.0
  %603 = vmatpush1.msra.mxu0 0.0
  %604 = vmatprep.subr.mxu0 0.0
  %605 = vmatpush1.msra.mxu0 0.0
  %606 = vmatprep.subr.mxu0 0.0
  %607 = vmatpush1.msra.mxu0 0.0
  %608 = vmatprep.subr.mxu0 0.0
  %609 = vmatpush1.msra.mxu0 0.0
  %610 = vmatprep.mubr.f32.mxu0 0.0
  %611 = vmatmul.mubr.f32.gmra.mrb[0].mxu0 %v544
  %v612 = vpop.f32.mrb[0].mxu0
  %v613 = vadd.f32 %v23, %v612
  %v614 = vpop.f32.mrb[0].mxu0
  %v615 = vadd.f32 %v27, %v614
  %616 = vdwg.mxu0
  %v617 = vld [vmem:[%s1] sm:$0xff]
  %v618 = vld [vmem:[%s1 + $0x8] sm:$0xff]
  %v619 = vld [vmem:[%s1 + $0x10] sm:$0xff]
  %v620 = vld [vmem:[%s1 + $0x18] sm:$0xff]
  %v621 = vsel %vm56, %v513, 0
  %623 = vmatprep.subr.mxu0 0.0
  %624 = vmatpush1.msra.mxu0 %v617
  %625 = vmatprep.subr.mxu0 0.0
  %626 = vmatpush1.msra.mxu0 %v618
  %627 = vmatprep.subr.mxu0 0.0
  %628 = vmatpush1.msra.mxu0 %v619
  %629 = vmatprep.subr.mxu0 0.0
  %630 = vmatpush1.msra.mxu0 %v620
  %631 = vmatprep.subr.mxu0 0.0
  %632 = vmatpush1.msra.mxu0 0.0
  %633 = vmatprep.subr.mxu0 0.0
  %634 = vmatpush1.msra.mxu0 0.0
  %635 = vmatprep.subr.mxu0 0.0
  %636 = vmatpush1.msra.mxu0 0.0
  %637 = vmatprep.subr.mxu0 0.0
  %638 = vmatpush1.msra.mxu0 0.0
  %639 = vmatprep.subr.mxu0 0.0
  %640 = vmatpush1.msra.mxu0 0.0
  %641 = vmatprep.subr.mxu0 0.0
  %642 = vmatpush1.msra.mxu0 0.0
  %643 = vmatprep.subr.mxu0 0.0
  %644 = vmatpush1.msra.mxu0 0.0
  %645 = vmatprep.subr.mxu0 0.0
  %646 = vmatpush1.msra.mxu0 0.0
  %647 = vmatprep.subr.mxu0 0.0
  %648 = vmatpush1.msra.mxu0 0.0
  %649 = vmatprep.subr.mxu0 0.0
  %650 = vmatpush1.msra.mxu0 0.0
  %651 = vmatprep.subr.mxu0 0.0
  %652 = vmatpush1.msra.mxu0 0.0
  %653 = vmatprep.subr.mxu0 0.0
  %654 = vmatpush1.msra.mxu0 0.0
  %655 = vmatprep.subr.mxu0 0.0
  %656 = vmatpush1.msra.mxu0 0.0
  %657 = vmatprep.subr.mxu0 0.0
  %658 = vmatpush1.msra.mxu0 0.0
  %659 = vmatprep.subr.mxu0 0.0
  %660 = vmatpush1.msra.mxu0 0.0
  %661 = vmatprep.subr.mxu0 0.0
  %662 = vmatpush1.msra.mxu0 0.0
  %663 = vmatprep.subr.mxu0 0.0
  %664 = vmatpush1.msra.mxu0 0.0
  %665 = vmatprep.subr.mxu0 0.0
  %666 = vmatpush1.msra.mxu0 0.0
  %667 = vmatprep.subr.mxu0 0.0
  %668 = vmatpush1.msra.mxu0 0.0
  %669 = vmatprep.subr.mxu0 0.0
  %670 = vmatpush1.msra.mxu0 0.0
  %671 = vmatprep.subr.mxu0 0.0
  %672 = vmatpush1.msra.mxu0 0.0
  %673 = vmatprep.subr.mxu0 0.0
  %674 = vmatpush1.msra.mxu0 0.0
  %675 = vmatprep.subr.mxu0 0.0
  %676 = vmatpush1.msra.mxu0 0.0
  %677 = vmatprep.subr.mxu0 0.0
  %678 = vmatpush1.msra.mxu0 0.0
  %679 = vmatprep.subr.mxu0 0.0
  %680 = vmatpush1.msra.mxu0 0.0
  %681 = vmatprep.subr.mxu0 0.0
  %682 = vmatpush1.msra.mxu0 0.0
  %683 = vmatprep.subr.mxu0 0.0
  %684 = vmatpush1.msra.mxu0 0.0
  %685 = vmatprep.subr.mxu0 0.0
  %686 = vmatpush1.msra.mxu0 0.0
  %687 = vmatprep.mubr.f32.mxu0 0.0
  %688 = vmatmul.mubr.f32.gmra.mrb[0].mxu0 %v621
  %v689 = vpop.f32.mrb[0].mxu0
  %v690 = vadd.f32 0.0, %v689
  %v691 = vpop.f32.mrb[0].mxu0
  %692 = vdwg.mxu0
  %v693 = vadd.f32 %v17, %v690
  %v694 = vmul.f32 %v693, 0.5
  %v695 = vtanh.pop %v694
  %v696 = vmul.f32 %v695, 0.5
  %v697 = vadd.f32 %v696, 0.5
  %v698 = vtanh.pop %v693
  %v699 = vmul.f32 %v697, %v479
  %701 = vrot.lane.b32.xlu0 %v698, 64
  %v702 = vpop.permute.xlu0 %701
  %v704 = vmul.f32 %v697, %v702
  %706 = vrot.lane.b32.xlu0 %v704, 32
  %v707 = vpop.permute.xlu0 %706
  %v709 = vadd.f32 %v699, %v707
  %v710 = vtanh.pop %v709
  %712 = vrot.lane.b32.xlu0 %v710, 64
  %v713 = vpop.permute.xlu0 %712
  %v715 = vmul.f32 %v697, %v713
  %v716 = vmul.f32 %v613, 0.5
  %v717 = vmul.f32 %v615, 0.5
  %v718 = vtanh.pop %v716
  %v719 = vtanh.pop %v717
  %v720 = vmul.f32 %v718, 0.5
  %v721 = vmul.f32 %v719, 0.5
  %v722 = vadd.f32 %v720, 0.5
  %v723 = vadd.f32 %v721, 0.5
  %v724 = vtanh.pop %v615
  %v725 = vmul.f32 %v722, %v501
  %v726 = vmul.f32 %v722, %v724
  %728 = vrot.lane.b32.xlu0 %v726, 64
  %v729 = vpop.permute.xlu0 %728
  %v731 = vadd.f32 %v725, %v729
  %v732 = vtanh.pop %v731
  %v733 = vmul.f32 %v723, %v732
  %735 = vrot.lane.b32.xlu0 %v733, 64
  %v736 = vpop.permute.xlu0 %735
  %v738 = vsel %vm278, %v736, %v731
  %s739 = scalar_lea.vmem %s4, 16
  %740 = vst [vmem:[%s739] sm:$0xff] %v738
  %742 = vrot.lane.b32.xlu0 %v715, 32
  %v743 = vpop.permute.xlu0 %742
  %745 = vrot.lane.b32.xlu0 %v733, 96
  %v746 = vpop.permute.xlu0 %745
  %v748 = vsel %vm56, %v743, %v746
  %v749 = vld [vmem:[%s2] sm:$0xff]
  %v750 = vld [vmem:[%s2 + $0x8] sm:$0xff]
  %v751 = vld [vmem:[%s2 + $0x10] sm:$0xff]
  %v752 = vld [vmem:[%s2 + $0x18] sm:$0xff]
  %v753 = vld [vmem:[%s2 + $0x20] sm:$0xff]
  %v754 = vld [vmem:[%s2 + $0x28] sm:$0xff]
  %v755 = vld [vmem:[%s2 + $0x30] sm:$0xff]
  %v756 = vld [vmem:[%s2 + $0x38] sm:$0xff]
  %v757 = vld [vmem:[%s2 + $0x40] sm:$0xff]
  %v758 = vld [vmem:[%s2 + $0x48] sm:$0xff]
  %v759 = vld [vmem:[%s2 + $0x50] sm:$0xff]
  %v760 = vld [vmem:[%s2 + $0x58] sm:$0xff]
  %v761 = vld [vmem:[%s2 + $0x60] sm:$0xff]
  %v762 = vld [vmem:[%s2 + $0x68] sm:$0xff]
  %v763 = vld [vmem:[%s2 + $0x70] sm:$0xff]
  %v764 = vld [vmem:[%s2 + $0x78] sm:$0xff]
  %v765 = vld [vmem:[%s2 + $0x80] sm:$0xff]
  %v766 = vld [vmem:[%s2 + $0x88] sm:$0xff]
  %v767 = vld [vmem:[%s2 + $0x90] sm:$0xff]
  %v768 = vld [vmem:[%s2 + $0x98] sm:$0xff]
  %v769 = vld [vmem:[%s2 + $0xa0] sm:$0xff]
  %v770 = vld [vmem:[%s2 + $0xa8] sm:$0xff]
  %v771 = vld [vmem:[%s2 + $0xb0] sm:$0xff]
  %v772 = vld [vmem:[%s2 + $0xb8] sm:$0xff]
  %v774 = vsel %vm82, %v748, 0
  %776 = vmatprep.subr.mxu0 %v750
  %777 = vmatpush1.msra.mxu0 %v749
  %778 = vmatprep.subr.mxu0 %v752
  %779 = vmatpush1.msra.mxu0 %v751
  %780 = vmatprep.subr.mxu0 %v754
  %781 = vmatpush1.msra.mxu0 %v753
  %782 = vmatprep.subr.mxu0 %v756
  %783 = vmatpush1.msra.mxu0 %v755
  %784 = vmatprep.subr.mxu0 %v758
  %785 = vmatpush1.msra.mxu0 %v757
  %786 = vmatprep.subr.mxu0 %v760
  %787 = vmatpush1.msra.mxu0 %v759
  %788 = vmatprep.subr.mxu0 %v762
  %789 = vmatpush1.msra.mxu0 %v761
  %790 = vmatprep.subr.mxu0 %v764
  %791 = vmatpush1.msra.mxu0 %v763
  %792 = vmatprep.subr.mxu0 %v766
  %793 = vmatpush1.msra.mxu0 %v765
  %794 = vmatprep.subr.mxu0 %v768
  %795 = vmatpush1.msra.mxu0 %v767
  %796 = vmatprep.subr.mxu0 %v770
  %797 = vmatpush1.msra.mxu0 %v769
  %798 = vmatprep.subr.mxu0 %v772
  %799 = vmatpush1.msra.mxu0 %v771
  %800 = vmatprep.subr.mxu0 0.0
  %801 = vmatpush1.msra.mxu0 0.0
  %802 = vmatprep.subr.mxu0 0.0
  %803 = vmatpush1.msra.mxu0 0.0
  %804 = vmatprep.subr.mxu0 0.0
  %805 = vmatpush1.msra.mxu0 0.0
  %806 = vmatprep.subr.mxu0 0.0
  %807 = vmatpush1.msra.mxu0 0.0
  %808 = vmatprep.subr.mxu0 0.0
  %809 = vmatpush1.msra.mxu0 0.0
  %810 = vmatprep.subr.mxu0 0.0
  %811 = vmatpush1.msra.mxu0 0.0
  %812 = vmatprep.subr.mxu0 0.0
  %813 = vmatpush1.msra.mxu0 0.0
  %814 = vmatprep.subr.mxu0 0.0
  %815 = vmatpush1.msra.mxu0 0.0
  %816 = vmatprep.subr.mxu0 0.0
  %817 = vmatpush1.msra.mxu0 0.0
  %818 = vmatprep.subr.mxu0 0.0
  %819 = vmatpush1.msra.mxu0 0.0
  %820 = vmatprep.subr.mxu0 0.0
  %821 = vmatpush1.msra.mxu0 0.0
  %822 = vmatprep.subr.mxu0 0.0
  %823 = vmatpush1.msra.mxu0 0.0
  %824 = vmatprep.subr.mxu0 0.0
  %825 = vmatpush1.msra.mxu0 0.0
  %826 = vmatprep.subr.mxu0 0.0
  %827 = vmatpush1.msra.mxu0 0.0
  %828 = vmatprep.subr.mxu0 0.0
  %829 = vmatpush1.msra.mxu0 0.0
  %830 = vmatprep.subr.mxu0 0.0
  %831 = vmatpush1.msra.mxu0 0.0
  %832 = vmatprep.subr.mxu0 0.0
  %833 = vmatpush1.msra.mxu0 0.0
  %834 = vmatprep.subr.mxu0 0.0
  %835 = vmatpush1.msra.mxu0 0.0
  %836 = vmatprep.subr.mxu0 0.0
  %837 = vmatpush1.msra.mxu0 0.0
  %838 = vmatprep.subr.mxu0 0.0
  %839 = vmatpush1.msra.mxu0 0.0
  %840 = vmatprep.mubr.f32.mxu0 0.0
  %841 = vmatmul.mubr.f32.gmra.mrb[0].mxu0 %v774
  %v842 = vpop.f32.mrb[0].mxu0
  %v843 = vadd.f32 %v23, %v842
  %v844 = vpop.f32.mrb[0].mxu0
  %v845 = vadd.f32 %v27, %v844
  %846 = vdwg.mxu0
  %v847 = vld [vmem:[%s1] sm:$0xff]
  %v848 = vld [vmem:[%s1 + $0x8] sm:$0xff]
  %v849 = vld [vmem:[%s1 + $0x10] sm:$0xff]
  %v850 = vld [vmem:[%s1 + $0x18] sm:$0xff]
  %v851 = vsel %vm56, %v743, 0
  %853 = vmatprep.subr.mxu0 0.0
  %854 = vmatpush1.msra.mxu0 %v847
  %855 = vmatprep.subr.mxu0 0.0
  %856 = vmatpush1.msra.mxu0 %v848
  %857 = vmatprep.subr.mxu0 0.0
  %858 = vmatpush1.msra.mxu0 %v849
  %859 = vmatprep.subr.mxu0 0.0
  %860 = vmatpush1.msra.mxu0 %v850
  %861 = vmatprep.subr.mxu0 0.0
  %862 = vmatpush1.msra.mxu0 0.0
  %863 = vmatprep.subr.mxu0 0.0
  %864 = vmatpush1.msra.mxu0 0.0
  %865 = vmatprep.subr.mxu0 0.0
  %866 = vmatpush1.msra.mxu0 0.0
  %867 = vmatprep.subr.mxu0 0.0
  %868 = vmatpush1.msra.mxu0 0.0
  %869 = vmatprep.subr.mxu0 0.0
  %870 = vmatpush1.msra.mxu0 0.0
  %871 = vmatprep.subr.mxu0 0.0
  %872 = vmatpush1.msra.mxu0 0.0
  %873 = vmatprep.subr.mxu0 0.0
  %874 = vmatpush1.msra.mxu0 0.0
  %875 = vmatprep.subr.mxu0 0.0
  %876 = vmatpush1.msra.mxu0 0.0
  %877 = vmatprep.subr.mxu0 0.0
  %878 = vmatpush1.msra.mxu0 0.0
  %879 = vmatprep.subr.mxu0 0.0
  %880 = vmatpush1.msra.mxu0 0.0
  %881 = vmatprep.subr.mxu0 0.0
  %882 = vmatpush1.msra.mxu0 0.0
  %883 = vmatprep.subr.mxu0 0.0
  %884 = vmatpush1.msra.mxu0 0.0
  %885 = vmatprep.subr.mxu0 0.0
  %886 = vmatpush1.msra.mxu0 0.0
  %887 = vmatprep.subr.mxu0 0.0
  %888 = vmatpush1.msra.mxu0 0.0
  %889 = vmatprep.subr.mxu0 0.0
  %890 = vmatpush1.msra.mxu0 0.0
  %891 = vmatprep.subr.mxu0 0.0
  %892 = vmatpush1.msra.mxu0 0.0
  %893 = vmatprep.subr.mxu0 0.0
  %894 = vmatpush1.msra.mxu0 0.0
  %895 = vmatprep.subr.mxu0 0.0
  %896 = vmatpush1.msra.mxu0 0.0
  %897 = vmatprep.subr.mxu0 0.0
  %898 = vmatpush1.msra.mxu0 0.0
  %899 = vmatprep.subr.mxu0 0.0
  %900 = vmatpush1.msra.mxu0 0.0
  %901 = vmatprep.subr.mxu0 0.0
  %902 = vmatpush1.msra.mxu0 0.0
  %903 = vmatprep.subr.mxu0 0.0
  %904 = vmatpush1.msra.mxu0 0.0
  %905 = vmatprep.subr.mxu0 0.0
  %906 = vmatpush1.msra.mxu0 0.0
  %907 = vmatprep.subr.mxu0 0.0
  %908 = vmatpush1.msra.mxu0 0.0
  %909 = vmatprep.subr.mxu0 0.0
  %910 = vmatpush1.msra.mxu0 0.0
  %911 = vmatprep.subr.mxu0 0.0
  %912 = vmatpush1.msra.mxu0 0.0
  %913 = vmatprep.subr.mxu0 0.0
  %914 = vmatpush1.msra.mxu0 0.0
  %915 = vmatprep.subr.mxu0 0.0
  %916 = vmatpush1.msra.mxu0 0.0
  %917 = vmatprep.mubr.f32.mxu0 0.0
  %918 = vmatmul.mubr.f32.gmra.mrb[0].mxu0 %v851
  %v919 = vpop.f32.mrb[0].mxu0
  %v920 = vadd.f32 0.0, %v919
  %v921 = vpop.f32.mrb[0].mxu0
  %922 = vdwg.mxu0
  %v923 = vadd.f32 %v17, %v920
  %v924 = vmul.f32 %v923, 0.5
  %v925 = vtanh.pop %v924
  %v926 = vmul.f32 %v925, 0.5
  %v927 = vadd.f32 %v926, 0.5
  %v928 = vtanh.pop %v923
  %v929 = vmul.f32 %v927, %v709
  %931 = vrot.lane.b32.xlu0 %v928, 64
  %v932 = vpop.permute.xlu0 %931
  %v934 = vmul.f32 %v927, %v932
  %936 = vrot.lane.b32.xlu0 %v934, 32
  %v937 = vpop.permute.xlu0 %936
  %v939 = vadd.f32 %v929, %v937
  %v940 = vtanh.pop %v939
  %942 = vrot.lane.b32.xlu0 %v940, 64
  %v943 = vpop.permute.xlu0 %942
  %v945 = vmul.f32 %v927, %v943
  %v946 = vmul.f32 %v843, 0.5
  %v947 = vmul.f32 %v845, 0.5
  %v948 = vtanh.pop %v946
  %v949 = vtanh.pop %v947
  %v950 = vmul.f32 %v948, 0.5
  %v951 = vmul.f32 %v949, 0.5
  %v952 = vadd.f32 %v950, 0.5
  %v953 = vadd.f32 %v951, 0.5
  %v954 = vtanh.pop %v845
  %v955 = vmul.f32 %v952, %v731
  %v956 = vmul.f32 %v952, %v954
  %958 = vrot.lane.b32.xlu0 %v956, 64
  %v959 = vpop.permute.xlu0 %958
  %v961 = vadd.f32 %v955, %v959
  %v962 = vtanh.pop %v961
  %v963 = vmul.f32 %v953, %v962
  %965 = vrot.lane.b32.xlu0 %v963, 64
  %v966 = vpop.permute.xlu0 %965
  %v968 = vsel %vm278, %v966, %v961
  %s969 = scalar_lea.vmem %s4, 24
  %970 = vst [vmem:[%s969] sm:$0xff] %v968
  %972 = vrot.lane.b32.xlu0 %v945, 32
  %v973 = vpop.permute.xlu0 %972
  %975 = vrot.lane.b32.xlu0 %v963, 96
  %v976 = vpop.permute.xlu0 %975
  %v978 = vsel %vm56, %v973, %v976
  %v979 = vld [vmem:[%s2] sm:$0xff]
  %v980 = vld [vmem:[%s2 + $0x8] sm:$0xff]
  %v981 = vld [vmem:[%s2 + $0x10] sm:$0xff]
  %v982 = vld [vmem:[%s2 + $0x18] sm:$0xff]
  %v983 = vld [vmem:[%s2 + $0x20] sm:$0xff]
  %v984 = vld [vmem:[%s2 + $0x28] sm:$0xff]
  %v985 = vld [vmem:[%s2 + $0x30] sm:$0xff]
  %v986 = vld [vmem:[%s2 + $0x38] sm:$0xff]
  %v987 = vld [vmem:[%s2 + $0x40] sm:$0xff]
  %v988 = vld [vmem:[%s2 + $0x48] sm:$0xff]
  %v989 = vld [vmem:[%s2 + $0x50] sm:$0xff]
  %v990 = vld [vmem:[%s2 + $0x58] sm:$0xff]
  %v991 = vld [vmem:[%s2 + $0x60] sm:$0xff]
  %v992 = vld [vmem:[%s2 + $0x68] sm:$0xff]
  %v993 = vld [vmem:[%s2 + $0x70] sm:$0xff]
  %v994 = vld [vmem:[%s2 + $0x78] sm:$0xff]
  %v995 = vld [vmem:[%s2 + $0x80] sm:$0xff]
  %v996 = vld [vmem:[%s2 + $0x88] sm:$0xff]
  %v997 = vld [vmem:[%s2 + $0x90] sm:$0xff]
  %v998 = vld [vmem:[%s2 + $0x98] sm:$0xff]
  %v999 = vld [vmem:[%s2 + $0xa0] sm:$0xff]
  %v1000 = vld [vmem:[%s2 + $0xa8] sm:$0xff]
  %v1001 = vld [vmem:[%s2 + $0xb0] sm:$0xff]
  %v1002 = vld [vmem:[%s2 + $0xb8] sm:$0xff]
  %v1004 = vsel %vm82, %v978, 0
  %1006 = vmatprep.subr.mxu0 %v980
  %1007 = vmatpush1.msra.mxu0 %v979
  %1008 = vmatprep.subr.mxu0 %v982
  %1009 = vmatpush1.msra.mxu0 %v981
  %1010 = vmatprep.subr.mxu0 %v984
  %1011 = vmatpush1.msra.mxu0 %v983
  %1012 = vmatprep.subr.mxu0 %v986
  %1013 = vmatpush1.msra.mxu0 %v985
  %1014 = vmatprep.subr.mxu0 %v988
  %1015 = vmatpush1.msra.mxu0 %v987
  %1016 = vmatprep.subr.mxu0 %v990
  %1017 = vmatpush1.msra.mxu0 %v989
  %1018 = vmatprep.subr.mxu0 %v992
  %1019 = vmatpush1.msra.mxu0 %v991
  %1020 = vmatprep.subr.mxu0 %v994
  %1021 = vmatpush1.msra.mxu0 %v993
  %1022 = vmatprep.subr.mxu0 %v996
  %1023 = vmatpush1.msra.mxu0 %v995
  %1024 = vmatprep.subr.mxu0 %v998
  %1025 = vmatpush1.msra.mxu0 %v997
  %1026 = vmatprep.subr.mxu0 %v1000
  %1027 = vmatpush1.msra.mxu0 %v999
  %1028 = vmatprep.subr.mxu0 %v1002
  %1029 = vmatpush1.msra.mxu0 %v1001
  %1030 = vmatprep.subr.mxu0 0.0
  %1031 = vmatpush1.msra.mxu0 0.0
  %1032 = vmatprep.subr.mxu0 0.0
  %1033 = vmatpush1.msra.mxu0 0.0
  %1034 = vmatprep.subr.mxu0 0.0
  %1035 = vmatpush1.msra.mxu0 0.0
  %1036 = vmatprep.subr.mxu0 0.0
  %1037 = vmatpush1.msra.mxu0 0.0
  %1038 = vmatprep.subr.mxu0 0.0
  %1039 = vmatpush1.msra.mxu0 0.0
  %1040 = vmatprep.subr.mxu0 0.0
  %1041 = vmatpush1.msra.mxu0 0.0
  %1042 = vmatprep.subr.mxu0 0.0
  %1043 = vmatpush1.msra.mxu0 0.0
  %1044 = vmatprep.subr.mxu0 0.0
  %1045 = vmatpush1.msra.mxu0 0.0
  %1046 = vmatprep.subr.mxu0 0.0
  %1047 = vmatpush1.msra.mxu0 0.0
  %1048 = vmatprep.subr.mxu0 0.0
  %1049 = vmatpush1.msra.mxu0 0.0
  %1050 = vmatprep.subr.mxu0 0.0
  %1051 = vmatpush1.msra.mxu0 0.0
  %1052 = vmatprep.subr.mxu0 0.0
  %1053 = vmatpush1.msra.mxu0 0.0
  %1054 = vmatprep.subr.mxu0 0.0
  %1055 = vmatpush1.msra.mxu0 0.0
  %1056 = vmatprep.subr.mxu0 0.0
  %1057 = vmatpush1.msra.mxu0 0.0
  %1058 = vmatprep.subr.mxu0 0.0
  %1059 = vmatpush1.msra.mxu0 0.0
  %1060 = vmatprep.subr.mxu0 0.0
  %1061 = vmatpush1.msra.mxu0 0.0
  %1062 = vmatprep.subr.mxu0 0.0
  %1063 = vmatpush1.msra.mxu0 0.0
  %1064 = vmatprep.subr.mxu0 0.0
  %1065 = vmatpush1.msra.mxu0 0.0
  %1066 = vmatprep.subr.mxu0 0.0
  %1067 = vmatpush1.msra.mxu0 0.0
  %1068 = vmatprep.subr.mxu0 0.0
  %1069 = vmatpush1.msra.mxu0 0.0
  %1070 = vmatprep.mubr.f32.mxu0 0.0
  %1071 = vmatmul.mubr.f32.gmra.mrb[0].mxu0 %v1004
  %v1072 = vpop.f32.mrb[0].mxu0
  %v1073 = vadd.f32 %v23, %v1072
  %v1074 = vpop.f32.mrb[0].mxu0
  %v1075 = vadd.f32 %v27, %v1074
  %1076 = vdwg.mxu0
  %v1077 = vld [vmem:[%s1] sm:$0xff]
  %v1078 = vld [vmem:[%s1 + $0x8] sm:$0xff]
  %v1079 = vld [vmem:[%s1 + $0x10] sm:$0xff]
  %v1080 = vld [vmem:[%s1 + $0x18] sm:$0xff]
  %v1081 = vsel %vm56, %v973, 0
  %1083 = vmatprep.subr.mxu0 0.0
  %1084 = vmatpush1.msra.mxu0 %v1077
  %1085 = vmatprep.subr.mxu0 0.0
  %1086 = vmatpush1.msra.mxu0 %v1078
  %1087 = vmatprep.subr.mxu0 0.0
  %1088 = vmatpush1.msra.mxu0 %v1079
  %1089 = vmatprep.subr.mxu0 0.0
  %1090 = vmatpush1.msra.mxu0 %v1080
  %1091 = vmatprep.subr.mxu0 0.0
  %1092 = vmatpush1.msra.mxu0 0.0
  %1093 = vmatprep.subr.mxu0 0.0
  %1094 = vmatpush1.msra.mxu0 0.0
  %1095 = vmatprep.subr.mxu0 0.0
  %1096 = vmatpush1.msra.mxu0 0.0
  %1097 = vmatprep.subr.mxu0 0.0
  %1098 = vmatpush1.msra.mxu0 0.0
  %1099 = vmatprep.subr.mxu0 0.0
  %1100 = vmatpush1.msra.mxu0 0.0
  %1101 = vmatprep.subr.mxu0 0.0
  %1102 = vmatpush1.msra.mxu0 0.0
  %1103 = vmatprep.subr.mxu0 0.0
  %1104 = vmatpush1.msra.mxu0 0.0
  %1105 = vmatprep.subr.mxu0 0.0
  %1106 = vmatpush1.msra.mxu0 0.0
  %1107 = vmatprep.subr.mxu0 0.0
  %1108 = vmatpush1.msra.mxu0 0.0
  %1109 = vmatprep.subr.mxu0 0.0
  %1110 = vmatpush1.msra.mxu0 0.0
  %1111 = vmatprep.subr.mxu0 0.0
  %1112 = vmatpush1.msra.mxu0 0.0
  %1113 = vmatprep.subr.mxu0 0.0
  %1114 = vmatpush1.msra.mxu0 0.0
  %1115 = vmatprep.subr.mxu0 0.0
  %1116 = vmatpush1.msra.mxu0 0.0
  %1117 = vmatprep.subr.mxu0 0.0
  %1118 = vmatpush1.msra.mxu0 0.0
  %1119 = vmatprep.subr.mxu0 0.0
  %1120 = vmatpush1.msra.mxu0 0.0
  %1121 = vmatprep.subr.mxu0 0.0
  %1122 = vmatpush1.msra.mxu0 0.0
  %1123 = vmatprep.subr.mxu0 0.0
  %1124 = vmatpush1.msra.mxu0 0.0
  %1125 = vmatprep.subr.mxu0 0.0
  %1126 = vmatpush1.msra.mxu0 0.0
  %1127 = vmatprep.subr.mxu0 0.0
  %1128 = vmatpush1.msra.mxu0 0.0
  %1129 = vmatprep.subr.mxu0 0.0
  %1130 = vmatpush1.msra.mxu0 0.0
  %1131 = vmatprep.subr.mxu0 0.0
  %1132 = vmatpush1.msra.mxu0 0.0
  %1133 = vmatprep.subr.mxu0 0.0
  %1134 = vmatpush1.msra.mxu0 0.0
  %1135 = vmatprep.subr.mxu0 0.0
  %1136 = vmatpush1.msra.mxu0 0.0
  %1137 = vmatprep.subr.mxu0 0.0
  %1138 = vmatpush1.msra.mxu0 0.0
  %1139 = vmatprep.subr.mxu0 0.0
  %1140 = vmatpush1.msra.mxu0 0.0
  %1141 = vmatprep.subr.mxu0 0.0
  %1142 = vmatpush1.msra.mxu0 0.0
  %1143 = vmatprep.subr.mxu0 0.0
  %1144 = vmatpush1.msra.mxu0 0.0
  %1145 = vmatprep.subr.mxu0 0.0
  %1146 = vmatpush1.msra.mxu0 0.0
  %1147 = vmatprep.mubr.f32.mxu0 0.0
  %1148 = vmatmul.mubr.f32.gmra.mrb[0].mxu0 %v1081
  %v1149 = vpop.f32.mrb[0].mxu0
  %v1150 = vadd.f32 0.0, %v1149
  %v1151 = vpop.f32.mrb[0].mxu0
  %1152 = vdwg.mxu0
  %v1153 = vadd.f32 %v17, %v1150
  %v1154 = vmul.f32 %v1153, 0.5
  %v1155 = vtanh.pop %v1154
  %v1156 = vmul.f32 %v1155, 0.5
  %v1157 = vadd.f32 %v1156, 0.5
  %v1158 = vtanh.pop %v1153
  %v1159 = vmul.f32 %v1157, %v939
  %1161 = vrot.lane.b32.xlu0 %v1158, 64
  %v1162 = vpop.permute.xlu0 %1161
  %v1164 = vmul.f32 %v1157, %v1162
  %1166 = vrot.lane.b32.xlu0 %v1164, 32
  %v1167 = vpop.permute.xlu0 %1166
  %v1169 = vadd.f32 %v1159, %v1167
  %v1170 = vtanh.pop %v1169
  %1172 = vrot.lane.b32.xlu0 %v1170, 64
  %v1173 = vpop.permute.xlu0 %1172
  %v1175 = vmul.f32 %v1157, %v1173
  %v1176 = vmul.f32 %v1073, 0.5
  %v1177 = vmul.f32 %v1075, 0.5
  %v1178 = vtanh.pop %v1176
  %v1179 = vtanh.pop %v1177
  %v1180 = vmul.f32 %v1178, 0.5
  %v1181 = vmul.f32 %v1179, 0.5
  %v1182 = vadd.f32 %v1180, 0.5
  %v1183 = vadd.f32 %v1181, 0.5
  %v1184 = vtanh.pop %v1075
  %v1185 = vmul.f32 %v1182, %v961
  %v1186 = vmul.f32 %v1182, %v1184
  %1188 = vrot.lane.b32.xlu0 %v1186, 64
  %v1189 = vpop.permute.xlu0 %1188
  %v1191 = vadd.f32 %v1185, %v1189
  %v1192 = vtanh.pop %v1191
  %v1193 = vmul.f32 %v1183, %v1192
  %1195 = vrot.lane.b32.xlu0 %v1193, 64
  %v1196 = vpop.permute.xlu0 %1195
  %v1198 = vsel %vm278, %v1196, %v1191
  %s1199 = scalar_lea.vmem %s4, 32
  %1200 = vst [vmem:[%s1199] sm:$0xff] %v1198
  %1202 = vrot.lane.b32.xlu0 %v1175, 32
  %v1203 = vpop.permute.xlu0 %1202
  %1205 = vrot.lane.b32.xlu0 %v1193, 96
  %v1206 = vpop.permute.xlu0 %1205
  %v1208 = vsel %vm56, %v1203, %v1206
  %v1209 = vld [vmem:[%s2] sm:$0xff]
  %v1210 = vld [vmem:[%s2 + $0x8] sm:$0xff]
  %v1211 = vld [vmem:[%s2 + $0x10] sm:$0xff]
  %v1212 = vld [vmem:[%s2 + $0x18] sm:$0xff]
  %v1213 = vld [vmem:[%s2 + $0x20] sm:$0xff]
  %v1214 = vld [vmem:[%s2 + $0x28] sm:$0xff]
  %v1215 = vld [vmem:[%s2 + $0x30] sm:$0xff]
  %v1216 = vld [vmem:[%s2 + $0x38] sm:$0xff]
  %v1217 = vld [vmem:[%s2 + $0x40] sm:$0xff]
  %v1218 = vld [vmem:[%s2 + $0x48] sm:$0xff]
  %v1219 = vld [vmem:[%s2 + $0x50] sm:$0xff]
  %v1220 = vld [vmem:[%s2 + $0x58] sm:$0xff]
  %v1221 = vld [vmem:[%s2 + $0x60] sm:$0xff]
  %v1222 = vld [vmem:[%s2 + $0x68] sm:$0xff]
  %v1223 = vld [vmem:[%s2 + $0x70] sm:$0xff]
  %v1224 = vld [vmem:[%s2 + $0x78] sm:$0xff]
  %v1225 = vld [vmem:[%s2 + $0x80] sm:$0xff]
  %v1226 = vld [vmem:[%s2 + $0x88] sm:$0xff]
  %v1227 = vld [vmem:[%s2 + $0x90] sm:$0xff]
  %v1228 = vld [vmem:[%s2 + $0x98] sm:$0xff]
  %v1229 = vld [vmem:[%s2 + $0xa0] sm:$0xff]
  %v1230 = vld [vmem:[%s2 + $0xa8] sm:$0xff]
  %v1231 = vld [vmem:[%s2 + $0xb0] sm:$0xff]
  %v1232 = vld [vmem:[%s2 + $0xb8] sm:$0xff]
  %v1234 = vsel %vm82, %v1208, 0
  %1236 = vmatprep.subr.mxu0 %v1210
  %1237 = vmatpush1.msra.mxu0 %v1209
  %1238 = vmatprep.subr.mxu0 %v1212
  %1239 = vmatpush1.msra.mxu0 %v1211
  %1240 = vmatprep.subr.mxu0 %v1214
  %1241 = vmatpush1.msra.mxu0 %v1213
  %1242 = vmatprep.subr.mxu0 %v1216
  %1243 = vmatpush1.msra.mxu0 %v1215
  %1244 = vmatprep.subr.mxu0 %v1218
  %1245 = vmatpush1.msra.mxu0 %v1217
  %1246 = vmatprep.subr.mxu0 %v1220
  %1247 = vmatpush1.msra.mxu0 %v1219
  %1248 = vmatprep.subr.mxu0 %v1222
  %1249 = vmatpush1.msra.mxu0 %v1221
  %1250 = vmatprep.subr.mxu0 %v1224
  %1251 = vmatpush1.msra.mxu0 %v1223
  %1252 = vmatprep.subr.mxu0 %v1226
  %1253 = vmatpush1.msra.mxu0 %v1225
  %1254 = vmatprep.subr.mxu0 %v1228
  %1255 = vmatpush1.msra.mxu0 %v1227
  %1256 = vmatprep.subr.mxu0 %v1230
  %1257 = vmatpush1.msra.mxu0 %v1229
  %1258 = vmatprep.subr.mxu0 %v1232
  %1259 = vmatpush1.msra.mxu0 %v1231
  %1260 = vmatprep.subr.mxu0 0.0
  %1261 = vmatpush1.msra.mxu0 0.0
  %1262 = vmatprep.subr.mxu0 0.0
  %1263 = vmatpush1.msra.mxu0 0.0
  %1264 = vmatprep.subr.mxu0 0.0
  %1265 = vmatpush1.msra.mxu0 0.0
  %1266 = vmatprep.subr.mxu0 0.0
  %1267 = vmatpush1.msra.mxu0 0.0
  %1268 = vmatprep.subr.mxu0 0.0
  %1269 = vmatpush1.msra.mxu0 0.0
  %1270 = vmatprep.subr.mxu0 0.0
  %1271 = vmatpush1.msra.mxu0 0.0
  %1272 = vmatprep.subr.mxu0 0.0
  %1273 = vmatpush1.msra.mxu0 0.0
  %1274 = vmatprep.subr.mxu0 0.0
  %1275 = vmatpush1.msra.mxu0 0.0
  %1276 = vmatprep.subr.mxu0 0.0
  %1277 = vmatpush1.msra.mxu0 0.0
  %1278 = vmatprep.subr.mxu0 0.0
  %1279 = vmatpush1.msra.mxu0 0.0
  %1280 = vmatprep.subr.mxu0 0.0
  %1281 = vmatpush1.msra.mxu0 0.0
  %1282 = vmatprep.subr.mxu0 0.0
  %1283 = vmatpush1.msra.mxu0 0.0
  %1284 = vmatprep.subr.mxu0 0.0
  %1285 = vmatpush1.msra.mxu0 0.0
  %1286 = vmatprep.subr.mxu0 0.0
  %1287 = vmatpush1.msra.mxu0 0.0
  %1288 = vmatprep.subr.mxu0 0.0
  %1289 = vmatpush1.msra.mxu0 0.0
  %1290 = vmatprep.subr.mxu0 0.0
  %1291 = vmatpush1.msra.mxu0 0.0
  %1292 = vmatprep.subr.mxu0 0.0
  %1293 = vmatpush1.msra.mxu0 0.0
  %1294 = vmatprep.subr.mxu0 0.0
  %1295 = vmatpush1.msra.mxu0 0.0
  %1296 = vmatprep.subr.mxu0 0.0
  %1297 = vmatpush1.msra.mxu0 0.0
  %1298 = vmatprep.subr.mxu0 0.0
  %1299 = vmatpush1.msra.mxu0 0.0
  %1300 = vmatprep.mubr.f32.mxu0 0.0
  %1301 = vmatmul.mubr.f32.gmra.mrb[0].mxu0 %v1234
  %v1302 = vpop.f32.mrb[0].mxu0
  %v1303 = vadd.f32 %v23, %v1302
  %v1304 = vpop.f32.mrb[0].mxu0
  %v1305 = vadd.f32 %v27, %v1304
  %1306 = vdwg.mxu0
  %v1307 = vld [vmem:[%s1] sm:$0xff]
  %v1308 = vld [vmem:[%s1 + $0x8] sm:$0xff]
  %v1309 = vld [vmem:[%s1 + $0x10] sm:$0xff]
  %v1310 = vld [vmem:[%s1 + $0x18] sm:$0xff]
  %v1311 = vsel %vm56, %v1203, 0
  %1313 = vmatprep.subr.mxu0 0.0
  %1314 = vmatpush1.msra.mxu0 %v1307
  %1315 = vmatprep.subr.mxu0 0.0
  %1316 = vmatpush1.msra.mxu0 %v1308
  %1317 = vmatprep.subr.mxu0 0.0
  %1318 = vmatpush1.msra.mxu0 %v1309
  %1319 = vmatprep.subr.mxu0 0.0
  %1320 = vmatpush1.msra.mxu0 %v1310
  %1321 = vmatprep.subr.mxu0 0.0
  %1322 = vmatpush1.msra.mxu0 0.0
  %1323 = vmatprep.subr.mxu0 0.0
  %1324 = vmatpush1.msra.mxu0 0.0
  %1325 = vmatprep.subr.mxu0 0.0
  %1326 = vmatpush1.msra.mxu0 0.0
  %1327 = vmatprep.subr.mxu0 0.0
  %1328 = vmatpush1.msra.mxu0 0.0
  %1329 = vmatprep.subr.mxu0 0.0
  %1330 = vmatpush1.msra.mxu0 0.0
  %1331 = vmatprep.subr.mxu0 0.0
  %1332 = vmatpush1.msra.mxu0 0.0
  %1333 = vmatprep.subr.mxu0 0.0
  %1334 = vmatpush1.msra.mxu0 0.0
  %1335 = vmatprep.subr.mxu0 0.0
  %1336 = vmatpush1.msra.mxu0 0.0
  %1337 = vmatprep.subr.mxu0 0.0
  %1338 = vmatpush1.msra.mxu0 0.0
  %1339 = vmatprep.subr.mxu0 0.0
  %1340 = vmatpush1.msra.mxu0 0.0
  %1341 = vmatprep.subr.mxu0 0.0
  %1342 = vmatpush1.msra.mxu0 0.0
  %1343 = vmatprep.subr.mxu0 0.0
  %1344 = vmatpush1.msra.mxu0 0.0
  %1345 = vmatprep.subr.mxu0 0.0
  %1346 = vmatpush1.msra.mxu0 0.0
  %1347 = vmatprep.subr.mxu0 0.0
  %1348 = vmatpush1.msra.mxu0 0.0
  %1349 = vmatprep.subr.mxu0 0.0
  %1350 = vmatpush1.msra.mxu0 0.0
  %1351 = vmatprep.subr.mxu0 0.0
  %1352 = vmatpush1.msra.mxu0 0.0
  %1353 = vmatprep.subr.mxu0 0.0
  %1354 = vmatpush1.msra.mxu0 0.0
  %1355 = vmatprep.subr.mxu0 0.0
  %1356 = vmatpush1.msra.mxu0 0.0
  %1357 = vmatprep.subr.mxu0 0.0
  %1358 = vmatpush1.msra.mxu0 0.0
  %1359 = vmatprep.subr.mxu0 0.0
  %1360 = vmatpush1.msra.mxu0 0.0
  %1361 = vmatprep.subr.mxu0 0.0
  %1362 = vmatpush1.msra.mxu0 0.0
  %1363 = vmatprep.subr.mxu0 0.0
  %1364 = vmatpush1.msra.mxu0 0.0
  %1365 = vmatprep.subr.mxu0 0.0
  %1366 = vmatpush1.msra.mxu0 0.0
  %1367 = vmatprep.subr.mxu0 0.0
  %1368 = vmatpush1.msra.mxu0 0.0
  %1369 = vmatprep.subr.mxu0 0.0
  %1370 = vmatpush1.msra.mxu0 0.0
  %1371 = vmatprep.subr.mxu0 0.0
  %1372 = vmatpush1.msra.mxu0 0.0
  %1373 = vmatprep.subr.mxu0 0.0
  %1374 = vmatpush1.msra.mxu0 0.0
  %1375 = vmatprep.subr.mxu0 0.0
  %1376 = vmatpush1.msra.mxu0 0.0
  %1377 = vmatprep.mubr.f32.mxu0 0.0
  %1378 = vmatmul.mubr.f32.gmra.mrb[0].mxu0 %v1311
  %v1379 = vpop.f32.mrb[0].mxu0
  %v1380 = vadd.f32 0.0, %v1379
  %v1381 = vpop.f32.mrb[0].mxu0
  %1382 = vdwg.mxu0
  %v1383 = vadd.f32 %v17, %v1380
  %v1384 = vmul.f32 %v1383, 0.5
  %v1385 = vtanh.pop %v1384
  %v1386 = vmul.f32 %v1385, 0.5
  %v1387 = vadd.f32 %v1386, 0.5
  %v1388 = vtanh.pop %v1383
  %v1389 = vmul.f32 %v1387, %v1169
  %1391 = vrot.lane.b32.xlu0 %v1388, 64
  %v1392 = vpop.permute.xlu0 %1391
  %v1394 = vmul.f32 %v1387, %v1392
  %1396 = vrot.lane.b32.xlu0 %v1394, 32
  %v1397 = vpop.permute.xlu0 %1396
  %v1399 = vadd.f32 %v1389, %v1397
  %v1400 = vtanh.pop %v1399
  %1402 = vrot.lane.b32.xlu0 %v1400, 64
  %v1403 = vpop.permute.xlu0 %1402
  %v1405 = vmul.f32 %v1387, %v1403
  %v1406 = vmul.f32 %v1303, 0.5
  %v1407 = vmul.f32 %v1305, 0.5
  %v1408 = vtanh.pop %v1406
  %v1409 = vtanh.pop %v1407
  %v1410 = vmul.f32 %v1408, 0.5
  %v1411 = vmul.f32 %v1409, 0.5
  %v1412 = vadd.f32 %v1410, 0.5
  %v1413 = vadd.f32 %v1411, 0.5
  %v1414 = vtanh.pop %v1305
  %v1415 = vmul.f32 %v1412, %v1191
  %v1416 = vmul.f32 %v1412, %v1414
  %1418 = vrot.lane.b32.xlu0 %v1416, 64
  %v1419 = vpop.permute.xlu0 %1418
  %v1421 = vadd.f32 %v1415, %v1419
  %v1422 = vtanh.pop %v1421
  %v1423 = vmul.f32 %v1413, %v1422
  %1425 = vrot.lane.b32.xlu0 %v1423, 64
  %v1426 = vpop.permute.xlu0 %1425
  %v1428 = vsel %vm278, %v1426, %v1421
  %s1429 = scalar_lea.vmem %s4, 40
  %1430 = vst [vmem:[%s1429] sm:$0xff] %v1428
  %1432 = vrot.lane.b32.xlu0 %v1405, 32
  %v1433 = vpop.permute.xlu0 %1432
  %1435 = vrot.lane.b32.xlu0 %v1423, 96
  %v1436 = vpop.permute.xlu0 %1435
  %v1438 = vsel %vm56, %v1433, %v1436
  %v1439 = vld [vmem:[%s2] sm:$0xff]
  %v1440 = vld [vmem:[%s2 + $0x8] sm:$0xff]
  %v1441 = vld [vmem:[%s2 + $0x10] sm:$0xff]
  %v1442 = vld [vmem:[%s2 + $0x18] sm:$0xff]
  %v1443 = vld [vmem:[%s2 + $0x20] sm:$0xff]
  %v1444 = vld [vmem:[%s2 + $0x28] sm:$0xff]
  %v1445 = vld [vmem:[%s2 + $0x30] sm:$0xff]
  %v1446 = vld [vmem:[%s2 + $0x38] sm:$0xff]
  %v1447 = vld [vmem:[%s2 + $0x40] sm:$0xff]
  %v1448 = vld [vmem:[%s2 + $0x48] sm:$0xff]
  %v1449 = vld [vmem:[%s2 + $0x50] sm:$0xff]
  %v1450 = vld [vmem:[%s2 + $0x58] sm:$0xff]
  %v1451 = vld [vmem:[%s2 + $0x60] sm:$0xff]
  %v1452 = vld [vmem:[%s2 + $0x68] sm:$0xff]
  %v1453 = vld [vmem:[%s2 + $0x70] sm:$0xff]
  %v1454 = vld [vmem:[%s2 + $0x78] sm:$0xff]
  %v1455 = vld [vmem:[%s2 + $0x80] sm:$0xff]
  %v1456 = vld [vmem:[%s2 + $0x88] sm:$0xff]
  %v1457 = vld [vmem:[%s2 + $0x90] sm:$0xff]
  %v1458 = vld [vmem:[%s2 + $0x98] sm:$0xff]
  %v1459 = vld [vmem:[%s2 + $0xa0] sm:$0xff]
  %v1460 = vld [vmem:[%s2 + $0xa8] sm:$0xff]
  %v1461 = vld [vmem:[%s2 + $0xb0] sm:$0xff]
  %v1462 = vld [vmem:[%s2 + $0xb8] sm:$0xff]
  %v1464 = vsel %vm82, %v1438, 0
  %1466 = vmatprep.subr.mxu0 %v1440
  %1467 = vmatpush1.msra.mxu0 %v1439
  %1468 = vmatprep.subr.mxu0 %v1442
  %1469 = vmatpush1.msra.mxu0 %v1441
  %1470 = vmatprep.subr.mxu0 %v1444
  %1471 = vmatpush1.msra.mxu0 %v1443
  %1472 = vmatprep.subr.mxu0 %v1446
  %1473 = vmatpush1.msra.mxu0 %v1445
  %1474 = vmatprep.subr.mxu0 %v1448
  %1475 = vmatpush1.msra.mxu0 %v1447
  %1476 = vmatprep.subr.mxu0 %v1450
  %1477 = vmatpush1.msra.mxu0 %v1449
  %1478 = vmatprep.subr.mxu0 %v1452
  %1479 = vmatpush1.msra.mxu0 %v1451
  %1480 = vmatprep.subr.mxu0 %v1454
  %1481 = vmatpush1.msra.mxu0 %v1453
  %1482 = vmatprep.subr.mxu0 %v1456
  %1483 = vmatpush1.msra.mxu0 %v1455
  %1484 = vmatprep.subr.mxu0 %v1458
  %1485 = vmatpush1.msra.mxu0 %v1457
  %1486 = vmatprep.subr.mxu0 %v1460
  %1487 = vmatpush1.msra.mxu0 %v1459
  %1488 = vmatprep.subr.mxu0 %v1462
  %1489 = vmatpush1.msra.mxu0 %v1461
  %1490 = vmatprep.subr.mxu0 0.0
  %1491 = vmatpush1.msra.mxu0 0.0
  %1492 = vmatprep.subr.mxu0 0.0
  %1493 = vmatpush1.msra.mxu0 0.0
  %1494 = vmatprep.subr.mxu0 0.0
  %1495 = vmatpush1.msra.mxu0 0.0
  %1496 = vmatprep.subr.mxu0 0.0
  %1497 = vmatpush1.msra.mxu0 0.0
  %1498 = vmatprep.subr.mxu0 0.0
  %1499 = vmatpush1.msra.mxu0 0.0
  %1500 = vmatprep.subr.mxu0 0.0
  %1501 = vmatpush1.msra.mxu0 0.0
  %1502 = vmatprep.subr.mxu0 0.0
  %1503 = vmatpush1.msra.mxu0 0.0
  %1504 = vmatprep.subr.mxu0 0.0
  %1505 = vmatpush1.msra.mxu0 0.0
  %1506 = vmatprep.subr.mxu0 0.0
  %1507 = vmatpush1.msra.mxu0 0.0
  %1508 = vmatprep.subr.mxu0 0.0
  %1509 = vmatpush1.msra.mxu0 0.0
  %1510 = vmatprep.subr.mxu0 0.0
  %1511 = vmatpush1.msra.mxu0 0.0
  %1512 = vmatprep.subr.mxu0 0.0
  %1513 = vmatpush1.msra.mxu0 0.0
  %1514 = vmatprep.subr.mxu0 0.0
  %1515 = vmatpush1.msra.mxu0 0.0
  %1516 = vmatprep.subr.mxu0 0.0
  %1517 = vmatpush1.msra.mxu0 0.0
  %1518 = vmatprep.subr.mxu0 0.0
  %1519 = vmatpush1.msra.mxu0 0.0
  %1520 = vmatprep.subr.mxu0 0.0
  %1521 = vmatpush1.msra.mxu0 0.0
  %1522 = vmatprep.subr.mxu0 0.0
  %1523 = vmatpush1.msra.mxu0 0.0
  %1524 = vmatprep.subr.mxu0 0.0
  %1525 = vmatpush1.msra.mxu0 0.0
  %1526 = vmatprep.subr.mxu0 0.0
  %1527 = vmatpush1.msra.mxu0 0.0
  %1528 = vmatprep.subr.mxu0 0.0
  %1529 = vmatpush1.msra.mxu0 0.0
  %1530 = vmatprep.mubr.f32.mxu0 0.0
  %1531 = vmatmul.mubr.f32.gmra.mrb[0].mxu0 %v1464
  %v1532 = vpop.f32.mrb[0].mxu0
  %v1533 = vadd.f32 %v23, %v1532
  %v1534 = vpop.f32.mrb[0].mxu0
  %v1535 = vadd.f32 %v27, %v1534
  %1536 = vdwg.mxu0
  %v1537 = vld [vmem:[%s1] sm:$0xff]
  %v1538 = vld [vmem:[%s1 + $0x8] sm:$0xff]
  %v1539 = vld [vmem:[%s1 + $0x10] sm:$0xff]
  %v1540 = vld [vmem:[%s1 + $0x18] sm:$0xff]
  %v1541 = vsel %vm56, %v1433, 0
  %1543 = vmatprep.subr.mxu0 0.0
  %1544 = vmatpush1.msra.mxu0 %v1537
  %1545 = vmatprep.subr.mxu0 0.0
  %1546 = vmatpush1.msra.mxu0 %v1538
  %1547 = vmatprep.subr.mxu0 0.0
  %1548 = vmatpush1.msra.mxu0 %v1539
  %1549 = vmatprep.subr.mxu0 0.0
  %1550 = vmatpush1.msra.mxu0 %v1540
  %1551 = vmatprep.subr.mxu0 0.0
  %1552 = vmatpush1.msra.mxu0 0.0
  %1553 = vmatprep.subr.mxu0 0.0
  %1554 = vmatpush1.msra.mxu0 0.0
  %1555 = vmatprep.subr.mxu0 0.0
  %1556 = vmatpush1.msra.mxu0 0.0
  %1557 = vmatprep.subr.mxu0 0.0
  %1558 = vmatpush1.msra.mxu0 0.0
  %1559 = vmatprep.subr.mxu0 0.0
  %1560 = vmatpush1.msra.mxu0 0.0
  %1561 = vmatprep.subr.mxu0 0.0
  %1562 = vmatpush1.msra.mxu0 0.0
  %1563 = vmatprep.subr.mxu0 0.0
  %1564 = vmatpush1.msra.mxu0 0.0
  %1565 = vmatprep.subr.mxu0 0.0
  %1566 = vmatpush1.msra.mxu0 0.0
  %1567 = vmatprep.subr.mxu0 0.0
  %1568 = vmatpush1.msra.mxu0 0.0
  %1569 = vmatprep.subr.mxu0 0.0
  %1570 = vmatpush1.msra.mxu0 0.0
  %1571 = vmatprep.subr.mxu0 0.0
  %1572 = vmatpush1.msra.mxu0 0.0
  %1573 = vmatprep.subr.mxu0 0.0
  %1574 = vmatpush1.msra.mxu0 0.0
  %1575 = vmatprep.subr.mxu0 0.0
  %1576 = vmatpush1.msra.mxu0 0.0
  %1577 = vmatprep.subr.mxu0 0.0
  %1578 = vmatpush1.msra.mxu0 0.0
  %1579 = vmatprep.subr.mxu0 0.0
  %1580 = vmatpush1.msra.mxu0 0.0
  %1581 = vmatprep.subr.mxu0 0.0
  %1582 = vmatpush1.msra.mxu0 0.0
  %1583 = vmatprep.subr.mxu0 0.0
  %1584 = vmatpush1.msra.mxu0 0.0
  %1585 = vmatprep.subr.mxu0 0.0
  %1586 = vmatpush1.msra.mxu0 0.0
  %1587 = vmatprep.subr.mxu0 0.0
  %1588 = vmatpush1.msra.mxu0 0.0
  %1589 = vmatprep.subr.mxu0 0.0
  %1590 = vmatpush1.msra.mxu0 0.0
  %1591 = vmatprep.subr.mxu0 0.0
  %1592 = vmatpush1.msra.mxu0 0.0
  %1593 = vmatprep.subr.mxu0 0.0
  %1594 = vmatpush1.msra.mxu0 0.0
  %1595 = vmatprep.subr.mxu0 0.0
  %1596 = vmatpush1.msra.mxu0 0.0
  %1597 = vmatprep.subr.mxu0 0.0
  %1598 = vmatpush1.msra.mxu0 0.0
  %1599 = vmatprep.subr.mxu0 0.0
  %1600 = vmatpush1.msra.mxu0 0.0
  %1601 = vmatprep.subr.mxu0 0.0
  %1602 = vmatpush1.msra.mxu0 0.0
  %1603 = vmatprep.subr.mxu0 0.0
  %1604 = vmatpush1.msra.mxu0 0.0
  %1605 = vmatprep.subr.mxu0 0.0
  %1606 = vmatpush1.msra.mxu0 0.0
  %1607 = vmatprep.mubr.f32.mxu0 0.0
  %1608 = vmatmul.mubr.f32.gmra.mrb[0].mxu0 %v1541
  %v1609 = vpop.f32.mrb[0].mxu0
  %v1610 = vadd.f32 0.0, %v1609
  %v1611 = vpop.f32.mrb[0].mxu0
  %1612 = vdwg.mxu0
  %v1613 = vadd.f32 %v17, %v1610
  %v1614 = vmul.f32 %v1613, 0.5
  %v1615 = vtanh.pop %v1614
  %v1616 = vmul.f32 %v1615, 0.5
  %v1617 = vadd.f32 %v1616, 0.5
  %v1618 = vtanh.pop %v1613
  %v1619 = vmul.f32 %v1617, %v1399
  %1621 = vrot.lane.b32.xlu0 %v1618, 64
  %v1622 = vpop.permute.xlu0 %1621
  %v1624 = vmul.f32 %v1617, %v1622
  %1626 = vrot.lane.b32.xlu0 %v1624, 32
  %v1627 = vpop.permute.xlu0 %1626
  %v1629 = vadd.f32 %v1619, %v1627
  %v1630 = vtanh.pop %v1629
  %1632 = vrot.lane.b32.xlu0 %v1630, 64
  %v1633 = vpop.permute.xlu0 %1632
  %v1635 = vmul.f32 %v1617, %v1633
  %v1636 = vmul.f32 %v1533, 0.5
  %v1637 = vmul.f32 %v1535, 0.5
  %v1638 = vtanh.pop %v1636
  %v1639 = vtanh.pop %v1637
  %v1640 = vmul.f32 %v1638, 0.5
  %v1641 = vmul.f32 %v1639, 0.5
  %v1642 = vadd.f32 %v1640, 0.5
  %v1643 = vadd.f32 %v1641, 0.5
  %v1644 = vtanh.pop %v1535
  %v1645 = vmul.f32 %v1642, %v1421
  %v1646 = vmul.f32 %v1642, %v1644
  %1648 = vrot.lane.b32.xlu0 %v1646, 64
  %v1649 = vpop.permute.xlu0 %1648
  %v1651 = vadd.f32 %v1645, %v1649
  %v1652 = vtanh.pop %v1651
  %v1653 = vmul.f32 %v1643, %v1652
  %1655 = vrot.lane.b32.xlu0 %v1653, 64
  %v1656 = vpop.permute.xlu0 %1655
  %v1658 = vsel %vm278, %v1656, %v1651
  %s1659 = scalar_lea.vmem %s4, 48
  %1660 = vst [vmem:[%s1659] sm:$0xff] %v1658
  %1662 = vrot.lane.b32.xlu0 %v1635, 32
  %v1663 = vpop.permute.xlu0 %1662
  %1665 = vrot.lane.b32.xlu0 %v1653, 96
  %v1666 = vpop.permute.xlu0 %1665
  %v1668 = vsel %vm56, %v1663, %v1666
  %v1669 = vld [vmem:[%s2] sm:$0xff]
  %v1670 = vld [vmem:[%s2 + $0x8] sm:$0xff]
  %v1671 = vld [vmem:[%s2 + $0x10] sm:$0xff]
  %v1672 = vld [vmem:[%s2 + $0x18] sm:$0xff]
  %v1673 = vld [vmem:[%s2 + $0x20] sm:$0xff]
  %v1674 = vld [vmem:[%s2 + $0x28] sm:$0xff]
  %v1675 = vld [vmem:[%s2 + $0x30] sm:$0xff]
  %v1676 = vld [vmem:[%s2 + $0x38] sm:$0xff]
  %v1677 = vld [vmem:[%s2 + $0x40] sm:$0xff]
  %v1678 = vld [vmem:[%s2 + $0x48] sm:$0xff]
  %v1679 = vld [vmem:[%s2 + $0x50] sm:$0xff]
  %v1680 = vld [vmem:[%s2 + $0x58] sm:$0xff]
  %v1681 = vld [vmem:[%s2 + $0x60] sm:$0xff]
  %v1682 = vld [vmem:[%s2 + $0x68] sm:$0xff]
  %v1683 = vld [vmem:[%s2 + $0x70] sm:$0xff]
  %v1684 = vld [vmem:[%s2 + $0x78] sm:$0xff]
  %v1685 = vld [vmem:[%s2 + $0x80] sm:$0xff]
  %v1686 = vld [vmem:[%s2 + $0x88] sm:$0xff]
  %v1687 = vld [vmem:[%s2 + $0x90] sm:$0xff]
  %v1688 = vld [vmem:[%s2 + $0x98] sm:$0xff]
  %v1689 = vld [vmem:[%s2 + $0xa0] sm:$0xff]
  %v1690 = vld [vmem:[%s2 + $0xa8] sm:$0xff]
  %v1691 = vld [vmem:[%s2 + $0xb0] sm:$0xff]
  %v1692 = vld [vmem:[%s2 + $0xb8] sm:$0xff]
  %v1694 = vsel %vm82, %v1668, 0
  %1696 = vmatprep.subr.mxu0 %v1670
  %1697 = vmatpush1.msra.mxu0 %v1669
  %1698 = vmatprep.subr.mxu0 %v1672
  %1699 = vmatpush1.msra.mxu0 %v1671
  %1700 = vmatprep.subr.mxu0 %v1674
  %1701 = vmatpush1.msra.mxu0 %v1673
  %1702 = vmatprep.subr.mxu0 %v1676
  %1703 = vmatpush1.msra.mxu0 %v1675
  %1704 = vmatprep.subr.mxu0 %v1678
  %1705 = vmatpush1.msra.mxu0 %v1677
  %1706 = vmatprep.subr.mxu0 %v1680
  %1707 = vmatpush1.msra.mxu0 %v1679
  %1708 = vmatprep.subr.mxu0 %v1682
  %1709 = vmatpush1.msra.mxu0 %v1681
  %1710 = vmatprep.subr.mxu0 %v1684
  %1711 = vmatpush1.msra.mxu0 %v1683
  %1712 = vmatprep.subr.mxu0 %v1686
  %1713 = vmatpush1.msra.mxu0 %v1685
  %1714 = vmatprep.subr.mxu0 %v1688
  %1715 = vmatpush1.msra.mxu0 %v1687
  %1716 = vmatprep.subr.mxu0 %v1690
  %1717 = vmatpush1.msra.mxu0 %v1689
  %1718 = vmatprep.subr.mxu0 %v1692
  %1719 = vmatpush1.msra.mxu0 %v1691
  %1720 = vmatprep.subr.mxu0 0.0
  %1721 = vmatpush1.msra.mxu0 0.0
  %1722 = vmatprep.subr.mxu0 0.0
  %1723 = vmatpush1.msra.mxu0 0.0
  %1724 = vmatprep.subr.mxu0 0.0
  %1725 = vmatpush1.msra.mxu0 0.0
  %1726 = vmatprep.subr.mxu0 0.0
  %1727 = vmatpush1.msra.mxu0 0.0
  %1728 = vmatprep.subr.mxu0 0.0
  %1729 = vmatpush1.msra.mxu0 0.0
  %1730 = vmatprep.subr.mxu0 0.0
  %1731 = vmatpush1.msra.mxu0 0.0
  %1732 = vmatprep.subr.mxu0 0.0
  %1733 = vmatpush1.msra.mxu0 0.0
  %1734 = vmatprep.subr.mxu0 0.0
  %1735 = vmatpush1.msra.mxu0 0.0
  %1736 = vmatprep.subr.mxu0 0.0
  %1737 = vmatpush1.msra.mxu0 0.0
  %1738 = vmatprep.subr.mxu0 0.0
  %1739 = vmatpush1.msra.mxu0 0.0
  %1740 = vmatprep.subr.mxu0 0.0
  %1741 = vmatpush1.msra.mxu0 0.0
  %1742 = vmatprep.subr.mxu0 0.0
  %1743 = vmatpush1.msra.mxu0 0.0
  %1744 = vmatprep.subr.mxu0 0.0
  %1745 = vmatpush1.msra.mxu0 0.0
  %1746 = vmatprep.subr.mxu0 0.0
  %1747 = vmatpush1.msra.mxu0 0.0
  %1748 = vmatprep.subr.mxu0 0.0
  %1749 = vmatpush1.msra.mxu0 0.0
  %1750 = vmatprep.subr.mxu0 0.0
  %1751 = vmatpush1.msra.mxu0 0.0
  %1752 = vmatprep.subr.mxu0 0.0
  %1753 = vmatpush1.msra.mxu0 0.0
  %1754 = vmatprep.subr.mxu0 0.0
  %1755 = vmatpush1.msra.mxu0 0.0
  %1756 = vmatprep.subr.mxu0 0.0
  %1757 = vmatpush1.msra.mxu0 0.0
  %1758 = vmatprep.subr.mxu0 0.0
  %1759 = vmatpush1.msra.mxu0 0.0
  %1760 = vmatprep.mubr.f32.mxu0 0.0
  %1761 = vmatmul.mubr.f32.gmra.mrb[0].mxu0 %v1694
  %v1762 = vpop.f32.mrb[0].mxu0
  %v1763 = vadd.f32 %v23, %v1762
  %v1764 = vpop.f32.mrb[0].mxu0
  %v1765 = vadd.f32 %v27, %v1764
  %1766 = vdwg.mxu0
  %v1767 = vmul.f32 %v1763, 0.5
  %v1768 = vmul.f32 %v1765, 0.5
  %v1769 = vtanh.pop %v1767
  %v1770 = vtanh.pop %v1768
  %v1771 = vmul.f32 %v1769, 0.5
  %v1772 = vmul.f32 %v1770, 0.5
  %v1773 = vadd.f32 %v1771, 0.5
  %v1774 = vadd.f32 %v1772, 0.5
  %v1775 = vtanh.pop %v1765
  %v1776 = vmul.f32 %v1773, %v1651
  %v1777 = vmul.f32 %v1773, %v1775
  %1779 = vrot.lane.b32.xlu0 %v1777, 64
  %v1780 = vpop.permute.xlu0 %1779
  %v1782 = vadd.f32 %v1776, %v1780
  %v1783 = vtanh.pop %v1782
  %v1784 = vmul.f32 %v1774, %v1783
  %1786 = vrot.lane.b32.xlu0 %v1784, 64
  %v1787 = vpop.permute.xlu0 %1786
  %v1789 = vsel %vm278, %v1787, %v1782
  %s1790 = scalar_lea.vmem %s4, 56
  %1791 = vst [vmem:[%s1790] sm:$0xff] %v1789
  // Predicated region
  $region18: #{decoder_forward.1} parent=0 // pred_check
    _
  $region19: #{decoder_forward.1} parent=0 // pred_check_branch
    %1793 = sbr.rel (0) target = $region21
  $region20: #{decoder_forward.1} parent=0 // pred_region
    _
  $region21: #{decoder_forward.1} parent=0 // pred_fallthru
    _
  // Predicated region
  $region22: #{decoder_forward.1} parent=0 // pred_check
    _
  $region23: #{decoder_forward.1} parent=0 // pred_check_branch
    %1795 = sbr.rel (0) target = $region25
  $region24: #{decoder_forward.1} parent=0 // pred_region
    _
  $region25: #{decoder_forward.1} parent=0 // pred_fallthru
    _

</llo_original>
